<compile_context>
chip_gen: v6e
topology: v6e:2x2x1
jax: 0.10.0
libtpu: 0.0.40
codegen_flags: <defaults>
</compile_context>

<pallas_src>
import functools
import jax
import jax.numpy as jnp
from jax import lax
from jax.experimental import pallas as pl
from jax.experimental.pallas import tpu as pltpu


def _rpn_kernel(p_ref, ws_ref, bs_ref, wh_ref, bh_ref, out_ref, *, A, OUTW):
    # shared 3x3x3 conv as im2col matmul (bf16 operands, f32 accumulate) + bias + ReLU
    shared = jnp.dot(p_ref[...], ws_ref[...], preferred_element_type=jnp.float32)
    shared = jnp.maximum(shared + bs_ref[...], 0.0)

    # fused heads: single matmul; columns = [l0 (A) | l1 (A) | bbox (6A) | zero pad]
    y = jnp.dot(shared.astype(wh_ref.dtype), wh_ref[...],
                preferred_element_type=jnp.float32) + bh_ref[...]

    # numerically-stable 2-way softmax over each anchor's (bg, fg) logit pair
    l0 = y[:, :A]
    l1 = y[:, A:2 * A]
    m = jnp.maximum(l0, l1)
    e0 = jnp.exp(l0 - m)
    e1 = jnp.exp(l1 - m)
    inv = pl.reciprocal(e0 + e1, approx=True)        # EUP slot, effectively free

    # single lane-dense 128-wide slab:  [cls 2A | bbox 6A | prob 2A | zeros]
    parts = [y[:, :8 * A], e0 * inv, e1 * inv]
    if OUTW > 10 * A:
        parts.append(jnp.zeros((y.shape[0], OUTW - 10 * A), jnp.float32))
    out_ref[...] = jnp.concatenate(parts, axis=1)    # one unmasked full-width store


def rpn_forward(x_ncdhw, params, anchor_stride, anchors_per_location,
                num_row_steps=2):
    w_s, b_s = params["w_shared"], params["b_shared"]
    w_c, b_c = params["w_class"], params["b_class"]
    w_b, b_b = params["w_bbox"], params["b_bbox"]

    B, C, D, H, W = x_ncdhw.shape
    Cc = w_s.shape[0]
    A = anchors_per_location
    s = anchor_stride
    Do = (D - 1) // s + 1
    Ho = (H - 1) // s + 1
    Wo = (W - 1) // s + 1

    # ---- glue: NCDHW -> NDHWC, zero-pad, im2col (stride = anchor_stride) ----
    # TODO(synk): at production feature-map sizes fold the 27-tap accumulation
    # into the kernel (K-axis grid + pl.when accumulator) to avoid this 27x
    # im2col HBM expansion.
    x = jnp.transpose(x_ncdhw, (0, 2, 3, 4, 1))
    xp = jnp.pad(x, ((0, 0), (1, 1), (1, 1), (1, 1), (0, 0)))
    slabs = []
    for kd in range(3):
        for kh in range(3):
            for kw in range(3):
                slabs.append(xp[:,
                                kd:kd + (Do - 1) * s + 1:s,
                                kh:kh + (Ho - 1) * s + 1:s,
                                kw:kw + (Wo - 1) * s + 1:s, :])
    patches = jnp.concatenate(slabs, axis=-1)                 # [B,Do,Ho,Wo,27C]
    M = B * Do * Ho * Wo
    K = 27 * C
    patches = patches.reshape(M, K)

    # pad contraction dim to a lane-aligned multiple of 128; bf16 MXU operands
    Kp = pl.cdiv(K, 128) * 128
    if Kp != K:
        patches = jnp.pad(patches, ((0, 0), (0, Kp - K)))
    patches = patches.astype(jnp.bfloat16)

    # ---- weights in matmul form ----
    Ws = jnp.transpose(w_s, (2, 3, 4, 1, 0)).reshape(K, Cc)   # rows (kd,kh,kw,c)
    if Kp != K:
        Ws = jnp.pad(Ws, ((0, Kp - K), (0, 0)))
    Ws = Ws.astype(jnp.bfloat16)
    bs = b_s.reshape(1, Cc).astype(jnp.float32)

    # fused, lane-padded head weight: columns [l0 | l1 | bbox | zeros]
    OUTW = max(128, pl.cdiv(10 * A, 128) * 128)
    Wc = w_c[:, :, 0, 0, 0].T                                 # [Cc, 2A], ch = 2a+k
    Wb = w_b[:, :, 0, 0, 0].T                                 # [Cc, 6A], ch = 6a+j
    Wh = jnp.concatenate([Wc[:, 0::2], Wc[:, 1::2], Wb], axis=1)        # [Cc, 8A]
    Wh = jnp.pad(Wh, ((0, 0), (0, OUTW - 8 * A))).astype(jnp.bfloat16)  # [Cc, OUTW]
    bh = jnp.concatenate([b_c[0::2], b_c[1::2], b_b])
    bh = jnp.pad(bh, (0, OUTW - 8 * A)).reshape(1, OUTW).astype(jnp.float32)

    # ---- row tiling: cover M in `num_row_steps` grid steps (2 -> both v7x TCs,
    # negligible extra overhead on single-TC v5e/v6e); cap for VMEM safety ----
    tile_m = -(-M // num_row_steps)           # ceil
    tile_m = -(-tile_m // 8) * 8              # sublane multiple
    tile_m = max(8, min(tile_m, 4096))
    Mp = pl.cdiv(M, tile_m) * tile_m
    if Mp != M:
        patches = jnp.pad(patches, ((0, Mp - M), (0, 0)))

    kernel = functools.partial(_rpn_kernel, A=A, OUTW=OUTW)
    slab = pl.pallas_call(
        kernel,
        out_shape=jax.ShapeDtypeStruct((Mp, OUTW), jnp.float32),
        grid_spec=pltpu.PrefetchScalarGridSpec(
            num_scalar_prefetch=0,
            grid=(Mp // tile_m,),
            in_specs=[pl.BlockSpec((tile_m, Kp), lambda i: (i, 0)),
                      pl.BlockSpec((Kp, Cc), lambda i: (0, 0)),
                      pl.BlockSpec((1, Cc), lambda i: (0, 0)),
                      pl.BlockSpec((Cc, OUTW), lambda i: (0, 0)),
                      pl.BlockSpec((1, OUTW), lambda i: (0, 0))],
            out_specs=pl.BlockSpec((tile_m, OUTW), lambda i: (i, 0))),
        compiler_params=pltpu.CompilerParams(
            dimension_semantics=("parallel",),
            vmem_limit_bytes=32 * 1024 * 1024),
    )(patches, Ws, bs, Wh, bh)

    # ---- glue: slice the fused slab apart and restore NDHWC/anchor layout ----
    slab = slab[:M]
    DHW = Do * Ho * Wo
    cls = slab[:, :2 * A]              # [k=0 anchors | k=1 anchors]
    bbox = slab[:, 2 * A:8 * A]        # channels already ordered (a, 6)
    prob = slab[:, 8 * A:10 * A]       # [p(k=0) anchors | p(k=1) anchors]
    cls = cls.reshape(B, DHW, 2, A).transpose(0, 1, 3, 2).reshape(B, DHW * A, 2)
    prob = prob.reshape(B, DHW, 2, A).transpose(0, 1, 3, 2).reshape(B, DHW * A, 2)
    bbox = bbox.reshape(B, DHW * A, 6)
    return [cls, prob, bbox]


def rpn_reference(x, params, anchor_stride):
    """Pure-JAX reference mirroring the PyTorch forward (for correctness check)."""
    w_s, b_s = params["w_shared"], params["b_shared"]
    w_c, b_c = params["w_class"], params["b_class"]
    w_b, b_b = params["w_bbox"], params["b_bbox"]
    dn = ("NCDHW", "OIDHW", "NCDHW")
    y = lax.conv_general_dilated(x, w_s, window_strides=(anchor_stride,) * 3,
                                 padding=[(1, 1)] * 3, dimension_numbers=dn)
    y = jnp.maximum(y + b_s[None, :, None, None, None], 0.0)
    logits = lax.conv_general_dilated(y, w_c, window_strides=(1, 1, 1),
                                      padding=[(0, 0)] * 3, dimension_numbers=dn)
    logits = logits + b_c[None, :, None, None, None]
    bbox = lax.conv_general_dilated(y, w_b, window_strides=(1, 1, 1),
                                    padding=[(0, 0)] * 3, dimension_numbers=dn)
    bbox = bbox + b_b[None, :, None, None, None]
    B = x.shape[0]
    logits = jnp.transpose(logits, (0, 2, 3, 4, 1)).reshape(B, -1, 2)
    probs = jax.nn.softmax(logits, axis=2)
    bbox = jnp.transpose(bbox, (0, 2, 3, 4, 1)).reshape(B, -1, 6)
    return [logits, probs, bbox]


if __name__ == "__main__":
    anchors_per_location = 3
    anchor_stride = 1
    channel = 4
    conv_channel = 32
    B, D, H, W = 2, 8, 8, 8

    key = jax.random.PRNGKey(0)
    keys = jax.random.split(key, 7)
    params = {
        "w_shared": 0.05 * jax.random.normal(keys[0], (conv_channel, channel, 3, 3, 3), jnp.float32),
        "b_shared": 0.05 * jax.random.normal(keys[1], (conv_channel,), jnp.float32),
        "w_class": 0.05 * jax.random.normal(keys[2], (2 * anchors_per_location, conv_channel, 1, 1, 1), jnp.float32),
        "b_class": 0.05 * jax.random.normal(keys[3], (2 * anchors_per_location,), jnp.float32),
        "w_bbox": 0.05 * jax.random.normal(keys[4], (6 * anchors_per_location, conv_channel, 1, 1, 1), jnp.float32),
        "b_bbox": 0.05 * jax.random.normal(keys[5], (6 * anchors_per_location,), jnp.float32),
    }
    x = jax.random.normal(keys[6], (B, channel, D, H, W), jnp.float32)

    outs = rpn_forward(x, params, anchor_stride, anchors_per_location)
    outs = jax.block_until_ready(outs)

    refs = rpn_reference(x, params, anchor_stride)
    for o, r in zip(outs, refs):
        assert o.shape == r.shape, (o.shape, r.shape)
        assert float(jnp.max(jnp.abs(o - r))) < 1e-2

    print("KERNEL_OK")
</pallas_src>

<mosaic_0001>
module attributes {stable_mosaic.version = 11 : i64} {
  func.func @_rpn_kernel(%arg0: i32, %arg1: memref<512x128xbf16, #tpu.memory_space<vmem>>, %arg2: memref<128x32xbf16, #tpu.memory_space<vmem>>, %arg3: memref<1x32xf32, #tpu.memory_space<vmem>>, %arg4: memref<32x128xbf16, #tpu.memory_space<vmem>>, %arg5: memref<1x128xf32, #tpu.memory_space<vmem>>, %arg6: memref<512x128xf32, #tpu.memory_space<vmem>>) attributes {dimension_semantics = [#tpu.dimension_semantics<parallel>], iteration_bounds = array<i64: 2>, scalar_prefetch = 0 : i64, scratch_operands = 0 : i64, tpu.core_type = #tpu.core_type<tc>, window_params = [{transform_indices = @transform_0, window_bounds = array<i64: 512, 128>}, {pipeline_mode = #tpu.pipeline_mode<synchronous>, transform_indices = @transform_1, window_bounds = array<i64: 128, 32>}, {pipeline_mode = #tpu.pipeline_mode<synchronous>, transform_indices = @transform_2, window_bounds = array<i64: 1, 32>}, {pipeline_mode = #tpu.pipeline_mode<synchronous>, transform_indices = @transform_3, window_bounds = array<i64: 32, 128>}, {pipeline_mode = #tpu.pipeline_mode<synchronous>, transform_indices = @transform_4, window_bounds = array<i64: 1, 128>}, {transform_indices = @transform_5, window_bounds = array<i64: 512, 128>}]} {
    %c0 = arith.constant 0 : index
    %c0_0 = arith.constant 0 : index
    %0 = vector.load %arg1[%c0, %c0_0] : memref<512x128xbf16, #tpu.memory_space<vmem>>, vector<512x128xbf16>
    %c0_1 = arith.constant 0 : index
    %c0_2 = arith.constant 0 : index
    %1 = vector.load %arg2[%c0_1, %c0_2] : memref<128x32xbf16, #tpu.memory_space<vmem>>, vector<128x32xbf16>
    %cst = arith.constant dense<0.000000e+00> : vector<512x32xf32>
    %2 = tpu.matmul %0, %1, %cst {dimension_numbers = #tpu.dot_dimension_numbers<[1], [0], [0], [1], [0, 0, 1, 1], [], []>} : vector<512x128xbf16>, vector<128x32xbf16>, vector<512x32xf32> -> vector<512x32xf32>
    %c0_3 = arith.constant 0 : index
    %c0_4 = arith.constant 0 : index
    %3 = vector.load %arg3[%c0_3, %c0_4] : memref<1x32xf32, #tpu.memory_space<vmem>>, vector<1x32xf32>
    %4 = vector.broadcast %3 : vector<1x32xf32> to vector<512x32xf32>
    %5 = arith.addf %2, %4 : vector<512x32xf32>
    %cst_5 = arith.constant 0.000000e+00 : f32
    %6 = vector.broadcast %cst_5 : f32 to vector<512x32xf32>
    %7 = arith.maximumf %5, %6 : vector<512x32xf32>
    %8 = arith.truncf %7 : vector<512x32xf32> to vector<512x32xbf16>
    %c0_6 = arith.constant 0 : index
    %c0_7 = arith.constant 0 : index
    %9 = vector.load %arg4[%c0_6, %c0_7] : memref<32x128xbf16, #tpu.memory_space<vmem>>, vector<32x128xbf16>
    %cst_8 = arith.constant dense<0.000000e+00> : vector<512x128xf32>
    %10 = tpu.matmul %8, %9, %cst_8 {dimension_numbers = #tpu.dot_dimension_numbers<[1], [0], [0], [1], [0, 0, 1, 1], [], []>} : vector<512x32xbf16>, vector<32x128xbf16>, vector<512x128xf32> -> vector<512x128xf32>
    %c0_9 = arith.constant 0 : index
    %c0_10 = arith.constant 0 : index
    %11 = vector.load %arg5[%c0_9, %c0_10] : memref<1x128xf32, #tpu.memory_space<vmem>>, vector<1x128xf32>
    %12 = vector.broadcast %11 : vector<1x128xf32> to vector<512x128xf32>
    %13 = arith.addf %10, %12 : vector<512x128xf32>
    %14 = vector.extract_strided_slice %13 {offsets = [0, 0], sizes = [512, 3], strides = [1, 1]} : vector<512x128xf32> to vector<512x3xf32>
    %15 = vector.extract_strided_slice %13 {offsets = [0, 3], sizes = [512, 3], strides = [1, 1]} : vector<512x128xf32> to vector<512x3xf32>
    %16 = arith.maximumf %14, %15 : vector<512x3xf32>
    %17 = arith.subf %14, %16 : vector<512x3xf32>
    %18 = math.exp %17 : vector<512x3xf32>
    %19 = arith.subf %15, %16 : vector<512x3xf32>
    %20 = math.exp %19 : vector<512x3xf32>
    %21 = arith.addf %18, %20 : vector<512x3xf32>
    %22 = tpu.reciprocal %21 {approx = true} : vector<512x3xf32> -> vector<512x3xf32>
    %23 = vector.extract_strided_slice %13 {offsets = [0, 0], sizes = [512, 24], strides = [1, 1]} : vector<512x128xf32> to vector<512x24xf32>
    %24 = arith.mulf %18, %22 : vector<512x3xf32>
    %25 = arith.mulf %20, %22 : vector<512x3xf32>
    %cst_11 = arith.constant 0.000000e+00 : f32
    %26 = vector.broadcast %cst_11 : f32 to vector<512x98xf32>
    %27 = tpu.concatenate %23, %24, %25, %26 in 1 : vector<512x24xf32>, vector<512x3xf32>, vector<512x3xf32>, vector<512x98xf32> -> vector<512x128xf32>
    %c0_12 = arith.constant 0 : index
    %c0_13 = arith.constant 0 : index
    %28 = vector.load %arg6[%c0_12, %c0_13] : memref<512x128xf32, #tpu.memory_space<vmem>>, vector<512x128xf32>
    tpu.vector_store %arg6[%c0_12, %c0_13], %27 {strides = array<i32>} : memref<512x128xf32, #tpu.memory_space<vmem>>, vector<512x128xf32>,
    return
  }
  func.func @transform_0(%arg0: i32) -> (i32, i32) {
    %c0_i32 = arith.constant 0 : i32
    %c0_i32_0 = arith.constant 0 : i32
    return %arg0, %c0_i32 : i32, i32
  }
  func.func @transform_1(%arg0: i32) -> (i32, i32) {
    %c0_i32 = arith.constant 0 : i32
    %c0_i32_0 = arith.constant 0 : i32
    %c0_i32_1 = arith.constant 0 : i32
    return %c0_i32, %c0_i32_0 : i32, i32
  }
  func.func @transform_2(%arg0: i32) -> (i32, i32) {
    %c0_i32 = arith.constant 0 : i32
    %c0_i32_0 = arith.constant 0 : i32
    %c0_i32_1 = arith.constant 0 : i32
    return %c0_i32, %c0_i32_0 : i32, i32
  }
  func.func @transform_3(%arg0: i32) -> (i32, i32) {
    %c0_i32 = arith.constant 0 : i32
    %c0_i32_0 = arith.constant 0 : i32
    %c0_i32_1 = arith.constant 0 : i32
    return %c0_i32, %c0_i32_0 : i32, i32
  }
  func.func @transform_4(%arg0: i32) -> (i32, i32) {
    %c0_i32 = arith.constant 0 : i32
    %c0_i32_0 = arith.constant 0 : i32
    %c0_i32_1 = arith.constant 0 : i32
    return %c0_i32, %c0_i32_0 : i32, i32
  }
  func.func @transform_5(%arg0: i32) -> (i32, i32) {
    %c0_i32 = arith.constant 0 : i32
    %c0_i32_0 = arith.constant 0 : i32
    return %arg0, %c0_i32 : i32, i32
  }
}

</mosaic_0001>

<llo_original>
// kernel: tpu_custom_call.1
$region0: #{tpu_custom_call.1}
  #allocation0 [shape = 'u32[]', space=smem, size = 0x4, offset = 0x4, fixed_abs, tag = 'smem constant byte address 0x4 - core index']
  #allocation1 [shape = 'u32[144,128]{1,0:T(1,128)}', space=vmem, size = 0x12000, scoped, tag = 'internal scratch']
  %s0 = inlined_call_operand.hbm [shape: bf16[1024,128], index: 0, kind: input, shape index: {}]
  %s1 = inlined_call_operand.vmem [shape: bf16[128,32], index: 1, kind: input, shape index: {}]
  %s2 = inlined_call_operand.vmem [shape: f32[1,32], index: 2, kind: input, shape index: {}]
  %s3 = inlined_call_operand.vmem [shape: bf16[32,128], index: 3, kind: input, shape index: {}]
  %s4 = inlined_call_operand.vmem [shape: f32[1,128], index: 4, kind: input, shape index: {}]
  %s5 = inlined_call_operand.hbm [shape: f32[1024,128], index: 5, kind: output, shape index: {}]
  %s6 = sld [smem:[#allocation0]]
  $region57: #{tpu_custom_call.1} parent=0
    _
  %s8 = ssub.s32 1, %s6
  %s9 = scalar_select 0, %s8, %s6
  $region1: #{tpu_custom_call.1} parent=0
    #allocation2 [shape = 'u8[262144]{0}', space=vmem, size = 0x40000, scoped, tag = 'input window, operand 0']
    #allocation3 [shape = 's32[2]{0}', space=sflag, size = 0x8, scoped, tag = 'scoped memory for tpu_custom_call.1']
    #allocation4 [shape = 's32[2]{0}', space=sflag, size = 0x8, scoped, tag = 'scoped memory for tpu_custom_call.1']
    #allocation5 [shape = 'u8[524288]{0}', space=vmem, size = 0x80000, scoped, tag = 'output window, operand 0']
    %10 = vsyncpa [#allocation3], 0
    %s11 = scalar_lea.sflag [#allocation3], 1
    %12 = vsyncpa %s11, 0
    %13 = vsyncpa [#allocation4], 0
    %s14 = scalar_lea.sflag [#allocation4], 1
    %15 = vsyncpa %s14, 0
    loop: start=0, step=1, limit=4
    $region2: #{tpu_custom_call.1} parent=1 // loop_pre_header
      _
    $region3: #{tpu_custom_call.1} parent=1 // loop_header
      %s17 = sphi 0, %s21
      %p18 = scmp.ge.s32.totalorder %s17, 4
      %s27 = sphi 0, %s29
      %s30 = sphi 0, %s27
      %s31 = sphi 0, %s30
      %s47 = sphi 0, %s31
      %s51 = sphi 0, %s51
      %s53 = sphi 0, %s51
      %s54 = sphi 0, %s53
      %s68 = sphi 0, %s54
      %s72 = sphi 0, %s72
      %s74 = sphi 0, %s72
      %s75 = sphi 0, %s74
      %s89 = sphi 0, %s75
      %s93 = sphi 0, %s93
      %s95 = sphi 0, %s93
      %s96 = sphi 0, %s95
      %s110 = sphi 0, %s96
      %s114 = sphi 0, %s114
      %s116 = sphi 0, %s114
      %s117 = sphi 0, %s116
      %s131 = sphi 0, %s117
      %s137 = sphi 0, %s139
      %s140 = sphi 0, %s137
      %s141 = sphi 0, %s140
      %s157 = sphi 0, %s141
    $region4: #{tpu_custom_call.1} parent=1 // loop_header_branch
      %20 = sbr.rel (%p18) target = $region8
    $region5: #{tpu_custom_call.1} parent=1 // loop_body
      %s22 = ssub.s32 %s17, 1
      %s23 = ssub.s32 %s17, 2
      %s24 = sadd.s32 %s17, 1
      %s25 = ssub.s32 %s17, %s24
      %p26 = scmp.eq.s32.totalorder %s25, 0
      %s28 = sadd.s32 %s27, 1
      %s29 = scalar_select %p26, %s27, %s28
      %p32 = pneg %p26
      %p33 = scmp.eq.s32.totalorder %s17, 1
      %p34 = por %p32, %p33
      %p35 = scmp.ne.s32.totalorder %s27, %s30
      %p36 = scmp.eq.s32.totalorder %s17, 0
      %p37 = por %p35, %p36
      %p38 = scmp.ne.s32.totalorder %s27, %s30
      %p39 = scmp.eq.s32.totalorder %s22, 1
      %p40 = por %p38, %p39
      %p41 = scmp.ne.s32.totalorder %s30, %s31
      %p42 = scmp.eq.s32.totalorder %s22, 0
      %p43 = por %p41, %p42
      %p44 = scmp.ne.s32.totalorder %s30, %s31
      %p45 = scmp.eq.s32.totalorder %s23, 1
      %p46 = por %p44, %p45
      %p48 = scmp.ne.s32.totalorder %s31, %s47
      %p49 = scmp.eq.s32.totalorder %s23, 0
      %p50 = por %p48, %p49
      %s52 = sadd.s32 %s51, 1
      %p55 = scmp.eq.s32.totalorder %s17, 1
      %p56 = scmp.ne.s32.totalorder %s51, %s53
      %p57 = scmp.eq.s32.totalorder %s17, 0
      %p58 = por %p56, %p57
      %p59 = scmp.ne.s32.totalorder %s51, %s53
      %p60 = scmp.eq.s32.totalorder %s22, 1
      %p61 = por %p59, %p60
      %p62 = scmp.ne.s32.totalorder %s53, %s54
      %p63 = scmp.eq.s32.totalorder %s22, 0
      %p64 = por %p62, %p63
      %p65 = scmp.ne.s32.totalorder %s53, %s54
      %p66 = scmp.eq.s32.totalorder %s23, 1
      %p67 = por %p65, %p66
      %p69 = scmp.ne.s32.totalorder %s54, %s68
      %p70 = scmp.eq.s32.totalorder %s23, 0
      %p71 = por %p69, %p70
      %s73 = sadd.s32 %s72, 1
      %p76 = scmp.eq.s32.totalorder %s17, 1
      %p77 = scmp.ne.s32.totalorder %s72, %s74
      %p78 = scmp.eq.s32.totalorder %s17, 0
      %p79 = por %p77, %p78
      %p80 = scmp.ne.s32.totalorder %s72, %s74
      %p81 = scmp.eq.s32.totalorder %s22, 1
      %p82 = por %p80, %p81
      %p83 = scmp.ne.s32.totalorder %s74, %s75
      %p84 = scmp.eq.s32.totalorder %s22, 0
      %p85 = por %p83, %p84
      %p86 = scmp.ne.s32.totalorder %s74, %s75
      %p87 = scmp.eq.s32.totalorder %s23, 1
      %p88 = por %p86, %p87
      %p90 = scmp.ne.s32.totalorder %s75, %s89
      %p91 = scmp.eq.s32.totalorder %s23, 0
      %p92 = por %p90, %p91
      %s94 = sadd.s32 %s93, 1
      %p97 = scmp.eq.s32.totalorder %s17, 1
      %p98 = scmp.ne.s32.totalorder %s93, %s95
      %p99 = scmp.eq.s32.totalorder %s17, 0
      %p100 = por %p98, %p99
      %p101 = scmp.ne.s32.totalorder %s93, %s95
      %p102 = scmp.eq.s32.totalorder %s22, 1
      %p103 = por %p101, %p102
      %p104 = scmp.ne.s32.totalorder %s95, %s96
      %p105 = scmp.eq.s32.totalorder %s22, 0
      %p106 = por %p104, %p105
      %p107 = scmp.ne.s32.totalorder %s95, %s96
      %p108 = scmp.eq.s32.totalorder %s23, 1
      %p109 = por %p107, %p108
      %p111 = scmp.ne.s32.totalorder %s96, %s110
      %p112 = scmp.eq.s32.totalorder %s23, 0
      %p113 = por %p111, %p112
      %s115 = sadd.s32 %s114, 1
      %p118 = scmp.eq.s32.totalorder %s17, 1
      %p119 = scmp.ne.s32.totalorder %s114, %s116
      %p120 = scmp.eq.s32.totalorder %s17, 0
      %p121 = por %p119, %p120
      %p122 = scmp.ne.s32.totalorder %s114, %s116
      %p123 = scmp.eq.s32.totalorder %s22, 1
      %p124 = por %p122, %p123
      %p125 = scmp.ne.s32.totalorder %s116, %s117
      %p126 = scmp.eq.s32.totalorder %s22, 0
      %p127 = por %p125, %p126
      %p128 = scmp.ne.s32.totalorder %s116, %s117
      %p129 = scmp.eq.s32.totalorder %s23, 1
      %p130 = por %p128, %p129
      %p132 = scmp.ne.s32.totalorder %s117, %s131
      %p133 = scmp.eq.s32.totalorder %s23, 0
      %p134 = por %p132, %p133
      %s135 = ssub.s32 %s17, %s24
      %p136 = scmp.eq.s32.totalorder %s135, 0
      %s138 = sadd.s32 %s137, 1
      %s139 = scalar_select %p136, %s137, %s138
      %p142 = pneg %p136
      %p143 = scmp.eq.s32.totalorder %s17, 1
      %p144 = por %p142, %p143
      %p145 = scmp.ne.s32.totalorder %s137, %s140
      %p146 = scmp.eq.s32.totalorder %s17, 0
      %p147 = por %p145, %p146
      %p148 = scmp.ne.s32.totalorder %s137, %s140
      %p149 = scmp.eq.s32.totalorder %s22, 1
      %p150 = por %p148, %p149
      %p151 = scmp.ne.s32.totalorder %s140, %s141
      %p152 = scmp.eq.s32.totalorder %s22, 0
      %p153 = por %p151, %p152
      %p154 = scmp.ne.s32.totalorder %s140, %s141
      %p155 = scmp.eq.s32.totalorder %s23, 1
      %p156 = por %p154, %p155
      %p158 = scmp.ne.s32.totalorder %s141, %s157
      %p159 = scmp.eq.s32.totalorder %s23, 0
      %p160 = por %p158, %p159
      %p161 = scmp.le.s32.totalorder 1, %s17
      %p162 = scmp.lt.s32.totalorder %s17, 3
      %p163 = pnand %p161, %p162
      %p164 = pneg %p163
      // Predicated region
      $region9: #{tpu_custom_call.1} parent=5 // pred_check
        _
      $region10: #{tpu_custom_call.1} parent=5 // pred_check_branch
        %166 = sbr.rel (%p163) target = $region12
      $region11: #{tpu_custom_call.1} parent=5 // pred_region
        %s167 = ssub.s32 %s17, 1
        // Predicated region
        $region13: #{tpu_custom_call.1} parent=11 // pred_check
          %p168 = pneg %p64
        $region14: #{tpu_custom_call.1} parent=11 // pred_check_branch
          %170 = sbr.rel (%p168) target = $region16
        $region15: #{tpu_custom_call.1} parent=11 // pred_region
          _
        $region16: #{tpu_custom_call.1} parent=11 // pred_fallthru
          _
        // Predicated region
        $region17: #{tpu_custom_call.1} parent=11 // pred_check
          %p171 = pneg %p85
        $region18: #{tpu_custom_call.1} parent=11 // pred_check_branch
          %173 = sbr.rel (%p171) target = $region20
        $region19: #{tpu_custom_call.1} parent=11 // pred_region
          _
        $region20: #{tpu_custom_call.1} parent=11 // pred_fallthru
          _
        // Predicated region
        $region21: #{tpu_custom_call.1} parent=11 // pred_check
          %p174 = pneg %p106
        $region22: #{tpu_custom_call.1} parent=11 // pred_check_branch
          %176 = sbr.rel (%p174) target = $region24
        $region23: #{tpu_custom_call.1} parent=11 // pred_region
          _
        $region24: #{tpu_custom_call.1} parent=11 // pred_fallthru
          _
        // Predicated region
        $region25: #{tpu_custom_call.1} parent=11 // pred_check
          %p177 = pneg %p127
        $region26: #{tpu_custom_call.1} parent=11 // pred_check_branch
          %179 = sbr.rel (%p177) target = $region28
        $region27: #{tpu_custom_call.1} parent=11 // pred_region
          _
        $region28: #{tpu_custom_call.1} parent=11 // pred_fallthru
          _
      $region12: #{tpu_custom_call.1} parent=5 // pred_fallthru
        _
      %p180 = scmp.lt.s32.totalorder %s17, 2
      // Predicated region
      $region29: #{tpu_custom_call.1} parent=5 // pred_check
        %p181 = pneg %p180
      $region30: #{tpu_custom_call.1} parent=5 // pred_check_branch
        %183 = sbr.rel (%p181) target = $region32
      $region31: #{tpu_custom_call.1} parent=5 // pred_region
        // Predicated region
        $region33: #{tpu_custom_call.1} parent=31 // pred_check
          %p184 = pneg %p37
        $region34: #{tpu_custom_call.1} parent=31 // pred_check_branch
          %186 = sbr.rel (%p184) target = $region36
        $region35: #{tpu_custom_call.1} parent=31 // pred_region
          %s187 = sand.u32 %s27, 1
          %s188 = scalar_lea.sflag [#allocation3], %s187
          %s189 = sand.u32 %s27, 1
          %s190 = smul.addr %s189, 256
          %s191 = scalar_lea.vmem [#allocation2], %s190
          %s192 = smul.u32 64, %s17
          %s194 = ssub.s32 4096, 4096
          %195 = vsyncadd %s188, %s194
          %s196 = smul.addr %s192, 64
          %s197 = scalar_lea.hbm %s0, %s196
          %s198 = sshll.u32 %s191, 4
          %s199 = int_to_ptr.vmem [resolvable:$true] %s198
          %204 = dma.hbm_to_vmem [thread:$0]  %s197, 4096, %s199, %s188, 64, 64, 4
        $region36: #{tpu_custom_call.1} parent=31 // pred_fallthru
          _
      $region32: #{tpu_custom_call.1} parent=5 // pred_fallthru
        _
      %p205 = scmp.le.s32.totalorder 1, %s17
      %p206 = scmp.lt.s32.totalorder %s17, 3
      %p207 = pnand %p205, %p206
      %p208 = pneg %p207
      // Predicated region
      $region37: #{tpu_custom_call.1} parent=5 // pred_check
        _
      $region38: #{tpu_custom_call.1} parent=5 // pred_check_branch
        %210 = sbr.rel (%p207) target = $region40
      $region39: #{tpu_custom_call.1} parent=5 // pred_region
        %s211 = ssub.s32 %s17, 1
        %s212 = sand.u32 %s30, 1
        %s213 = scalar_lea.sflag [#allocation3], %s212
        %s214 = sand.u32 %s30, 1
        %s215 = smul.addr %s214, 256
        %s216 = scalar_lea.vmem [#allocation2], %s215
        // Predicated region
        $region41: #{tpu_custom_call.1} parent=39 // pred_check
          %p217 = pneg %p43
        $region42: #{tpu_custom_call.1} parent=39 // pred_check_branch
          %219 = sbr.rel (%p217) target = $region44
        $region43: #{tpu_custom_call.1} parent=39 // pred_region
          %220 = dma.done %s213, 4096
        $region44: #{tpu_custom_call.1} parent=39 // pred_fallthru
          _
        %s221 = sand.u32 %s30, 1
        %s222 = scalar_lea.sflag [#allocation3], %s221
        %s223 = sand.u32 %s30, 1
        %s224 = smul.addr %s223, 256
        %s225 = scalar_lea.vmem [#allocation2], %s224
        %p226 = pneg %p43
        %p227 = pneg %p40
        %p228 = pneg %p64
        %p229 = pneg %p61
        %p230 = pneg %p85
        %p231 = pneg %p82
        %p232 = pneg %p106
        %p233 = pneg %p103
        %p234 = pneg %p127
        %p235 = pneg %p124
        %p236 = pneg %p153
        %p237 = pneg %p150
        %s238 = sand.u32 %s140, 1
        %s239 = scalar_lea.sflag [#allocation4], %s238
        %s240 = sand.u32 %s140, 1
        %s241 = smul.addr %s240, 512
        %s242 = scalar_lea.vmem [#allocation5], %s241
        %s243 = smul.u32 64, %s22
        %s244 = smul.u32 64, %s22
        %v246 = vld [vmem:[%s216] sm:$0xf]
        %v247 = vld [vmem:[%s216 + $0x4] sm:$0xf]
        %v248 = vld [vmem:[%s216 + $0x8] sm:$0xf]
        %v249 = vld [vmem:[%s216 + $0xc] sm:$0xf]
        %v250 = vld [vmem:[%s216 + $0x10] sm:$0xf]
        %v251 = vld [vmem:[%s216 + $0x14] sm:$0xf]
        %v252 = vld [vmem:[%s216 + $0x18] sm:$0xf]
        %v253 = vld [vmem:[%s216 + $0x1c] sm:$0xf]
        %v254 = vld [vmem:[%s216 + $0x20] sm:$0xf]
        %v255 = vld [vmem:[%s216 + $0x24] sm:$0xf]
        %v256 = vld [vmem:[%s216 + $0x28] sm:$0xf]
        %v257 = vld [vmem:[%s216 + $0x2c] sm:$0xf]
        %v258 = vld [vmem:[%s216 + $0x30] sm:$0xf]
        %v259 = vld [vmem:[%s216 + $0x34] sm:$0xf]
        %v260 = vld [vmem:[%s216 + $0x38] sm:$0xf]
        %v261 = vld [vmem:[%s216 + $0x3c] sm:$0xf]
        %v262 = vld [vmem:[%s216 + $0x40] sm:$0xf]
        %v263 = vld [vmem:[%s216 + $0x44] sm:$0xf]
        %v264 = vld [vmem:[%s216 + $0x48] sm:$0xf]
        %v265 = vld [vmem:[%s216 + $0x4c] sm:$0xf]
        %v266 = vld [vmem:[%s216 + $0x50] sm:$0xf]
        %v267 = vld [vmem:[%s216 + $0x54] sm:$0xf]
        %v268 = vld [vmem:[%s216 + $0x58] sm:$0xf]
        %v269 = vld [vmem:[%s216 + $0x5c] sm:$0xf]
        %v270 = vld [vmem:[%s216 + $0x60] sm:$0xf]
        %v271 = vld [vmem:[%s216 + $0x64] sm:$0xf]
        %v272 = vld [vmem:[%s216 + $0x68] sm:$0xf]
        %v273 = vld [vmem:[%s216 + $0x6c] sm:$0xf]
        %v274 = vld [vmem:[%s216 + $0x70] sm:$0xf]
        %v275 = vld [vmem:[%s216 + $0x74] sm:$0xf]
        %v276 = vld [vmem:[%s216 + $0x78] sm:$0xf]
        %v277 = vld [vmem:[%s216 + $0x7c] sm:$0xf]
        %v278 = vld [vmem:[%s216 + $0x80] sm:$0xf]
        %v279 = vld [vmem:[%s216 + $0x84] sm:$0xf]
        %v280 = vld [vmem:[%s216 + $0x88] sm:$0xf]
        %v281 = vld [vmem:[%s216 + $0x8c] sm:$0xf]
        %v282 = vld [vmem:[%s216 + $0x90] sm:$0xf]
        %v283 = vld [vmem:[%s216 + $0x94] sm:$0xf]
        %v284 = vld [vmem:[%s216 + $0x98] sm:$0xf]
        %v285 = vld [vmem:[%s216 + $0x9c] sm:$0xf]
        %v286 = vld [vmem:[%s216 + $0xa0] sm:$0xf]
        %v287 = vld [vmem:[%s216 + $0xa4] sm:$0xf]
        %v288 = vld [vmem:[%s216 + $0xa8] sm:$0xf]
        %v289 = vld [vmem:[%s216 + $0xac] sm:$0xf]
        %v290 = vld [vmem:[%s216 + $0xb0] sm:$0xf]
        %v291 = vld [vmem:[%s216 + $0xb4] sm:$0xf]
        %v292 = vld [vmem:[%s216 + $0xb8] sm:$0xf]
        %v293 = vld [vmem:[%s216 + $0xbc] sm:$0xf]
        %v294 = vld [vmem:[%s216 + $0xc0] sm:$0xf]
        %v295 = vld [vmem:[%s216 + $0xc4] sm:$0xf]
        %v296 = vld [vmem:[%s216 + $0xc8] sm:$0xf]
        %v297 = vld [vmem:[%s216 + $0xcc] sm:$0xf]
        %v298 = vld [vmem:[%s216 + $0xd0] sm:$0xf]
        %v299 = vld [vmem:[%s216 + $0xd4] sm:$0xf]
        %v300 = vld [vmem:[%s216 + $0xd8] sm:$0xf]
        %v301 = vld [vmem:[%s216 + $0xdc] sm:$0xf]
        %v302 = vld [vmem:[%s216 + $0xe0] sm:$0xf]
        %v303 = vld [vmem:[%s216 + $0xe4] sm:$0xf]
        %v304 = vld [vmem:[%s216 + $0xe8] sm:$0xf]
        %v305 = vld [vmem:[%s216 + $0xec] sm:$0xf]
        %v306 = vld [vmem:[%s216 + $0xf0] sm:$0xf]
        %v307 = vld [vmem:[%s216 + $0xf4] sm:$0xf]
        %v308 = vld [vmem:[%s216 + $0xf8] sm:$0xf]
        %v309 = vld [vmem:[%s216 + $0xfc] sm:$0xf]
        %v310 = vld [vmem:[%s1] sm:$0xf]
        %v311 = vld [vmem:[%s1 + $0x4] sm:$0xf]
        %v312 = vld [vmem:[%s1 + $0x8] sm:$0xf]
        %v313 = vld [vmem:[%s1 + $0xc] sm:$0xf]
        %v314 = vld [vmem:[%s1 + $0x10] sm:$0xf]
        %v315 = vld [vmem:[%s1 + $0x14] sm:$0xf]
        %v316 = vld [vmem:[%s1 + $0x18] sm:$0xf]
        %v317 = vld [vmem:[%s1 + $0x1c] sm:$0xf]
        %v318 = vld [vmem:[%s1 + $0x20] sm:$0xf]
        %v319 = vld [vmem:[%s1 + $0x24] sm:$0xf]
        %v320 = vld [vmem:[%s1 + $0x28] sm:$0xf]
        %v321 = vld [vmem:[%s1 + $0x2c] sm:$0xf]
        %v322 = vld [vmem:[%s1 + $0x30] sm:$0xf]
        %v323 = vld [vmem:[%s1 + $0x34] sm:$0xf]
        %v324 = vld [vmem:[%s1 + $0x38] sm:$0xf]
        %v325 = vld [vmem:[%s1 + $0x3c] sm:$0xf]
        %v326 = vld [vmem:[%s2] sm:$0x1]
        %v328 = vlaneseq
        %v329 = vshrl.u32 %v328, 7
        %v330 = vsub.s32 0, %v329
        %v331 = vrot.slane %v326, %v330
        %v397 = vunpack.c.l.b16 %v246
        %v398 = vunpack.c.l.b16 %v247
        %v399 = vunpack.c.l.b16 %v248
        %v400 = vunpack.c.l.b16 %v249
        %v401 = vunpack.c.l.b16 %v250
        %v402 = vunpack.c.l.b16 %v251
        %v403 = vunpack.c.l.b16 %v252
        %v404 = vunpack.c.l.b16 %v253
        %v405 = vunpack.c.l.b16 %v254
        %v406 = vunpack.c.l.b16 %v255
        %v407 = vunpack.c.l.b16 %v256
        %v408 = vunpack.c.l.b16 %v257
        %v409 = vunpack.c.l.b16 %v258
        %v410 = vunpack.c.l.b16 %v259
        %v411 = vunpack.c.l.b16 %v260
        %v412 = vunpack.c.l.b16 %v261
        %v413 = vunpack.c.l.b16 %v262
        %v414 = vunpack.c.l.b16 %v263
        %v415 = vunpack.c.l.b16 %v264
        %v416 = vunpack.c.l.b16 %v265
        %v417 = vunpack.c.l.b16 %v266
        %v418 = vunpack.c.l.b16 %v267
        %v419 = vunpack.c.l.b16 %v268
        %v420 = vunpack.c.l.b16 %v269
        %v421 = vunpack.c.l.b16 %v270
        %v422 = vunpack.c.l.b16 %v271
        %v423 = vunpack.c.l.b16 %v272
        %v424 = vunpack.c.l.b16 %v273
        %v425 = vunpack.c.l.b16 %v274
        %v426 = vunpack.c.l.b16 %v275
        %v427 = vunpack.c.l.b16 %v276
        %v428 = vunpack.c.l.b16 %v277
        %v429 = vunpack.c.l.b16 %v278
        %v430 = vunpack.c.l.b16 %v279
        %v431 = vunpack.c.l.b16 %v280
        %v432 = vunpack.c.l.b16 %v281
        %v433 = vunpack.c.l.b16 %v282
        %v434 = vunpack.c.l.b16 %v283
        %v435 = vunpack.c.l.b16 %v284
        %v436 = vunpack.c.l.b16 %v285
        %v437 = vunpack.c.l.b16 %v286
        %v438 = vunpack.c.l.b16 %v287
        %v439 = vunpack.c.l.b16 %v288
        %v440 = vunpack.c.l.b16 %v289
        %v441 = vunpack.c.l.b16 %v290
        %v442 = vunpack.c.l.b16 %v291
        %v443 = vunpack.c.l.b16 %v292
        %v444 = vunpack.c.l.b16 %v293
        %v445 = vunpack.c.l.b16 %v294
        %v446 = vunpack.c.l.b16 %v295
        %v447 = vunpack.c.l.b16 %v296
        %v448 = vunpack.c.l.b16 %v297
        %v449 = vunpack.c.l.b16 %v298
        %v450 = vunpack.c.l.b16 %v299
        %v451 = vunpack.c.l.b16 %v300
        %v452 = vunpack.c.l.b16 %v301
        %v453 = vunpack.c.l.b16 %v302
        %v454 = vunpack.c.l.b16 %v303
        %v455 = vunpack.c.l.b16 %v304
        %v456 = vunpack.c.l.b16 %v305
        %v457 = vunpack.c.l.b16 %v306
        %v458 = vunpack.c.l.b16 %v307
        %v459 = vunpack.c.l.b16 %v308
        %v460 = vunpack.c.l.b16 %v309
        %v461 = vpack.c.b16 %v398, %v397
        %v462 = vpack.c.b16 %v400, %v399
        %v463 = vpack.c.b16 %v402, %v401
        %v464 = vpack.c.b16 %v404, %v403
        %v465 = vpack.c.b16 %v406, %v405
        %v466 = vpack.c.b16 %v408, %v407
        %v467 = vpack.c.b16 %v410, %v409
        %v468 = vpack.c.b16 %v412, %v411
        %v469 = vpack.c.b16 %v414, %v413
        %v470 = vpack.c.b16 %v416, %v415
        %v471 = vpack.c.b16 %v418, %v417
        %v472 = vpack.c.b16 %v420, %v419
        %v473 = vpack.c.b16 %v422, %v421
        %v474 = vpack.c.b16 %v424, %v423
        %v475 = vpack.c.b16 %v426, %v425
        %v476 = vpack.c.b16 %v428, %v427
        %v477 = vpack.c.b16 %v430, %v429
        %v478 = vpack.c.b16 %v432, %v431
        %v479 = vpack.c.b16 %v434, %v433
        %v480 = vpack.c.b16 %v436, %v435
        %v481 = vpack.c.b16 %v438, %v437
        %v482 = vpack.c.b16 %v440, %v439
        %v483 = vpack.c.b16 %v442, %v441
        %v484 = vpack.c.b16 %v444, %v443
        %v485 = vpack.c.b16 %v446, %v445
        %v486 = vpack.c.b16 %v448, %v447
        %v487 = vpack.c.b16 %v450, %v449
        %v488 = vpack.c.b16 %v452, %v451
        %v489 = vpack.c.b16 %v454, %v453
        %v490 = vpack.c.b16 %v456, %v455
        %v491 = vpack.c.b16 %v458, %v457
        %v492 = vpack.c.b16 %v460, %v459
        %v541 = vunpack.c.l.b16 %v310
        %v542 = vunpack.c.l.b16 %v311
        %v543 = vunpack.c.l.b16 %v312
        %v544 = vunpack.c.l.b16 %v313
        %v545 = vunpack.c.l.b16 %v314
        %v546 = vunpack.c.l.b16 %v315
        %v547 = vunpack.c.l.b16 %v316
        %v548 = vunpack.c.l.b16 %v317
        %v549 = vunpack.c.l.b16 %v318
        %v550 = vunpack.c.l.b16 %v319
        %v551 = vunpack.c.l.b16 %v320
        %v552 = vunpack.c.l.b16 %v321
        %v553 = vunpack.c.l.b16 %v322
        %v554 = vunpack.c.l.b16 %v323
        %v555 = vunpack.c.l.b16 %v324
        %v556 = vunpack.c.l.b16 %v325
        %v557 = vpack.c.b16 %v542, %v541
        %v558 = vpack.c.b16 %v544, %v543
        %v559 = vpack.c.b16 %v546, %v545
        %v560 = vpack.c.b16 %v548, %v547
        %v561 = vpack.c.b16 %v550, %v549
        %v562 = vpack.c.b16 %v552, %v551
        %v563 = vpack.c.b16 %v554, %v553
        %v564 = vpack.c.b16 %v556, %v555
        %573 = vmatprep.subr.bf16.mxu0 0
        %574 = vmatpush1.bf16.msra.mxu0 %v564
        %575 = vmatprep.subr.bf16.mxu0 0
        %576 = vmatpush1.bf16.msra.mxu0 %v563
        %577 = vmatprep.subr.bf16.mxu0 0
        %578 = vmatpush1.bf16.msra.mxu0 %v562
        %579 = vmatprep.subr.bf16.mxu0 0
        %580 = vmatpush1.bf16.msra.mxu0 %v561
        %581 = vmatprep.subr.bf16.mxu0 0
        %582 = vmatpush1.bf16.msra.mxu0 %v560
        %583 = vmatprep.subr.bf16.mxu0 0
        %584 = vmatpush1.bf16.msra.mxu0 %v559
        %585 = vmatprep.subr.bf16.mxu0 0
        %586 = vmatpush1.bf16.msra.mxu0 %v558
        %587 = vmatprep.subr.bf16.mxu0 0
        %588 = vmatpush1.bf16.msra.mxu0 %v557
        %589 = vmatprep.subr.bf16.mxu0 0
        %590 = vmatpush2.bf16.msra.mxu0 0
        %591 = vmatprep.subr.bf16.mxu0 0
        %592 = vmatpush2.bf16.msra.mxu0 0
        %593 = vmatprep.subr.bf16.mxu0 0
        %594 = vmatpush2.bf16.msra.mxu0 0
        %595 = vmatprep.subr.bf16.mxu0 0
        %596 = vmatpush2.bf16.msra.mxu0 0
        %597 = vmatprep.subr.bf16.mxu0 0
        %598 = vmatpush2.bf16.msra.mxu0 0
        %599 = vmatprep.subr.bf16.mxu0 0
        %600 = vmatpush2.bf16.msra.mxu0 0
        %601 = vmatprep.subr.bf16.mxu0 0
        %602 = vmatpush2.bf16.msra.mxu0 0
        %603 = vmatprep.subr.bf16.mxu0 0
        %604 = vmatpush2.bf16.msra.mxu0 0
        %605 = vmatprep.mubr.bf16.mxu0 0
        %606 = vmatmul.mubr.bf16.gmra.mxu0 %v461
        %v607 = vpop.f32.mrf.mxu0
        %v608 = vadd.f32 %v331, %v607
        %v609 = vpop.f32.mrf.mxu0
        %v610 = vpop.f32.mrf.mxu0
        %v611 = vadd.f32 %v331, %v610
        %v612 = vpop.f32.mrf.mxu0
        %613 = vmatprep.mubr.bf16.mxu0 0
        %614 = vmatmul.mubr.bf16.gmra.mxu0 %v462
        %v615 = vpop.f32.mrf.mxu0
        %v616 = vadd.f32 %v331, %v615
        %v617 = vpop.f32.mrf.mxu0
        %v618 = vpop.f32.mrf.mxu0
        %v619 = vadd.f32 %v331, %v618
        %v620 = vpop.f32.mrf.mxu0
        %621 = vmatprep.mubr.bf16.mxu0 0
        %622 = vmatmul.mubr.bf16.gmra.mxu0 %v463
        %v623 = vpop.f32.mrf.mxu0
        %v624 = vadd.f32 %v331, %v623
        %v625 = vpop.f32.mrf.mxu0
        %v626 = vpop.f32.mrf.mxu0
        %v627 = vadd.f32 %v331, %v626
        %v628 = vpop.f32.mrf.mxu0
        %629 = vmatprep.mubr.bf16.mxu0 0
        %630 = vmatmul.mubr.bf16.gmra.mxu0 %v464
        %v631 = vpop.f32.mrf.mxu0
        %v632 = vadd.f32 %v331, %v631
        %v633 = vpop.f32.mrf.mxu0
        %v634 = vpop.f32.mrf.mxu0
        %v635 = vadd.f32 %v331, %v634
        %v636 = vpop.f32.mrf.mxu0
        %637 = vmatprep.mubr.bf16.mxu0 0
        %638 = vmatmul.mubr.bf16.gmra.mxu0 %v465
        %v639 = vpop.f32.mrf.mxu0
        %v640 = vadd.f32 %v331, %v639
        %v641 = vpop.f32.mrf.mxu0
        %v642 = vpop.f32.mrf.mxu0
        %v643 = vadd.f32 %v331, %v642
        %v644 = vpop.f32.mrf.mxu0
        %645 = vmatprep.mubr.bf16.mxu0 0
        %646 = vmatmul.mubr.bf16.gmra.mxu0 %v466
        %v647 = vpop.f32.mrf.mxu0
        %v648 = vadd.f32 %v331, %v647
        %v649 = vpop.f32.mrf.mxu0
        %v650 = vpop.f32.mrf.mxu0
        %v651 = vadd.f32 %v331, %v650
        %v652 = vpop.f32.mrf.mxu0
        %653 = vmatprep.mubr.bf16.mxu0 0
        %654 = vmatmul.mubr.bf16.gmra.mxu0 %v467
        %v655 = vpop.f32.mrf.mxu0
        %v656 = vadd.f32 %v331, %v655
        %v657 = vpop.f32.mrf.mxu0
        %v658 = vpop.f32.mrf.mxu0
        %v659 = vadd.f32 %v331, %v658
        %v660 = vpop.f32.mrf.mxu0
        %661 = vmatprep.mubr.bf16.mxu0 0
        %662 = vmatmul.mubr.bf16.gmra.mxu0 %v468
        %v663 = vpop.f32.mrf.mxu0
        %v664 = vadd.f32 %v331, %v663
        %v665 = vpop.f32.mrf.mxu0
        %v666 = vpop.f32.mrf.mxu0
        %v667 = vadd.f32 %v331, %v666
        %v668 = vpop.f32.mrf.mxu0
        %669 = vmatprep.mubr.bf16.mxu0 0
        %670 = vmatmul.mubr.bf16.gmra.mxu0 %v469
        %v671 = vpop.f32.mrf.mxu0
        %v672 = vadd.f32 %v331, %v671
        %v673 = vpop.f32.mrf.mxu0
        %v674 = vpop.f32.mrf.mxu0
        %v675 = vadd.f32 %v331, %v674
        %v676 = vpop.f32.mrf.mxu0
        %677 = vmatprep.mubr.bf16.mxu0 0
        %678 = vmatmul.mubr.bf16.gmra.mxu0 %v470
        %v679 = vpop.f32.mrf.mxu0
        %v680 = vadd.f32 %v331, %v679
        %v681 = vpop.f32.mrf.mxu0
        %v682 = vpop.f32.mrf.mxu0
        %v683 = vadd.f32 %v331, %v682
        %v684 = vpop.f32.mrf.mxu0
        %685 = vmatprep.mubr.bf16.mxu0 0
        %686 = vmatmul.mubr.bf16.gmra.mxu0 %v471
        %v687 = vpop.f32.mrf.mxu0
        %v688 = vadd.f32 %v331, %v687
        %v689 = vpop.f32.mrf.mxu0
        %v690 = vpop.f32.mrf.mxu0
        %v691 = vadd.f32 %v331, %v690
        %v692 = vpop.f32.mrf.mxu0
        %693 = vmatprep.mubr.bf16.mxu0 0
        %694 = vmatmul.mubr.bf16.gmra.mxu0 %v472
        %v695 = vpop.f32.mrf.mxu0
        %v696 = vadd.f32 %v331, %v695
        %v697 = vpop.f32.mrf.mxu0
        %v698 = vpop.f32.mrf.mxu0
        %v699 = vadd.f32 %v331, %v698
        %v700 = vpop.f32.mrf.mxu0
        %701 = vmatprep.mubr.bf16.mxu0 0
        %702 = vmatmul.mubr.bf16.gmra.mxu0 %v473
        %v703 = vpop.f32.mrf.mxu0
        %v704 = vadd.f32 %v331, %v703
        %v705 = vpop.f32.mrf.mxu0
        %v706 = vpop.f32.mrf.mxu0
        %v707 = vadd.f32 %v331, %v706
        %v708 = vpop.f32.mrf.mxu0
        %709 = vmatprep.mubr.bf16.mxu0 0
        %710 = vmatmul.mubr.bf16.gmra.mxu0 %v474
        %v711 = vpop.f32.mrf.mxu0
        %v712 = vadd.f32 %v331, %v711
        %v713 = vpop.f32.mrf.mxu0
        %v714 = vpop.f32.mrf.mxu0
        %v715 = vadd.f32 %v331, %v714
        %v716 = vpop.f32.mrf.mxu0
        %717 = vmatprep.mubr.bf16.mxu0 0
        %718 = vmatmul.mubr.bf16.gmra.mxu0 %v475
        %v719 = vpop.f32.mrf.mxu0
        %v720 = vadd.f32 %v331, %v719
        %v721 = vpop.f32.mrf.mxu0
        %v722 = vpop.f32.mrf.mxu0
        %v723 = vadd.f32 %v331, %v722
        %v724 = vpop.f32.mrf.mxu0
        %725 = vmatprep.mubr.bf16.mxu0 0
        %726 = vmatmul.mubr.bf16.gmra.mxu0 %v476
        %v727 = vpop.f32.mrf.mxu0
        %v728 = vadd.f32 %v331, %v727
        %v729 = vpop.f32.mrf.mxu0
        %v730 = vpop.f32.mrf.mxu0
        %v731 = vadd.f32 %v331, %v730
        %v732 = vpop.f32.mrf.mxu0
        %733 = vmatprep.mubr.bf16.mxu0 0
        %734 = vmatmul.mubr.bf16.gmra.mxu0 %v477
        %v735 = vpop.f32.mrf.mxu0
        %v736 = vadd.f32 %v331, %v735
        %v737 = vpop.f32.mrf.mxu0
        %v738 = vpop.f32.mrf.mxu0
        %v739 = vadd.f32 %v331, %v738
        %v740 = vpop.f32.mrf.mxu0
        %741 = vmatprep.mubr.bf16.mxu0 0
        %742 = vmatmul.mubr.bf16.gmra.mxu0 %v478
        %v743 = vpop.f32.mrf.mxu0
        %v744 = vadd.f32 %v331, %v743
        %v745 = vpop.f32.mrf.mxu0
        %v746 = vpop.f32.mrf.mxu0
        %v747 = vadd.f32 %v331, %v746
        %v748 = vpop.f32.mrf.mxu0
        %749 = vmatprep.mubr.bf16.mxu0 0
        %750 = vmatmul.mubr.bf16.gmra.mxu0 %v479
        %v751 = vpop.f32.mrf.mxu0
        %v752 = vadd.f32 %v331, %v751
        %v753 = vpop.f32.mrf.mxu0
        %v754 = vpop.f32.mrf.mxu0
        %v755 = vadd.f32 %v331, %v754
        %v756 = vpop.f32.mrf.mxu0
        %757 = vmatprep.mubr.bf16.mxu0 0
        %758 = vmatmul.mubr.bf16.gmra.mxu0 %v480
        %v759 = vpop.f32.mrf.mxu0
        %v760 = vadd.f32 %v331, %v759
        %v761 = vpop.f32.mrf.mxu0
        %v762 = vpop.f32.mrf.mxu0
        %v763 = vadd.f32 %v331, %v762
        %v764 = vpop.f32.mrf.mxu0
        %765 = vmatprep.mubr.bf16.mxu0 0
        %766 = vmatmul.mubr.bf16.gmra.mxu0 %v481
        %v767 = vpop.f32.mrf.mxu0
        %v768 = vadd.f32 %v331, %v767
        %v769 = vpop.f32.mrf.mxu0
        %v770 = vpop.f32.mrf.mxu0
        %v771 = vadd.f32 %v331, %v770
        %v772 = vpop.f32.mrf.mxu0
        %773 = vmatprep.mubr.bf16.mxu0 0
        %774 = vmatmul.mubr.bf16.gmra.mxu0 %v482
        %v775 = vpop.f32.mrf.mxu0
        %v776 = vadd.f32 %v331, %v775
        %v777 = vpop.f32.mrf.mxu0
        %v778 = vpop.f32.mrf.mxu0
        %v779 = vadd.f32 %v331, %v778
        %v780 = vpop.f32.mrf.mxu0
        %781 = vmatprep.mubr.bf16.mxu0 0
        %782 = vmatmul.mubr.bf16.gmra.mxu0 %v483
        %v783 = vpop.f32.mrf.mxu0
        %v784 = vadd.f32 %v331, %v783
        %v785 = vpop.f32.mrf.mxu0
        %v786 = vpop.f32.mrf.mxu0
        %v787 = vadd.f32 %v331, %v786
        %v788 = vpop.f32.mrf.mxu0
        %789 = vmatprep.mubr.bf16.mxu0 0
        %790 = vmatmul.mubr.bf16.gmra.mxu0 %v484
        %v791 = vpop.f32.mrf.mxu0
        %v792 = vadd.f32 %v331, %v791
        %v793 = vpop.f32.mrf.mxu0
        %v794 = vpop.f32.mrf.mxu0
        %v795 = vadd.f32 %v331, %v794
        %v796 = vpop.f32.mrf.mxu0
        %797 = vmatprep.mubr.bf16.mxu0 0
        %798 = vmatmul.mubr.bf16.gmra.mxu0 %v485
        %v799 = vpop.f32.mrf.mxu0
        %v800 = vadd.f32 %v331, %v799
        %v801 = vpop.f32.mrf.mxu0
        %v802 = vpop.f32.mrf.mxu0
        %v803 = vadd.f32 %v331, %v802
        %v804 = vpop.f32.mrf.mxu0
        %805 = vmatprep.mubr.bf16.mxu0 0
        %806 = vmatmul.mubr.bf16.gmra.mxu0 %v486
        %v807 = vpop.f32.mrf.mxu0
        %v808 = vadd.f32 %v331, %v807
        %v809 = vpop.f32.mrf.mxu0
        %v810 = vpop.f32.mrf.mxu0
        %v811 = vadd.f32 %v331, %v810
        %v812 = vpop.f32.mrf.mxu0
        %813 = vmatprep.mubr.bf16.mxu0 0
        %814 = vmatmul.mubr.bf16.gmra.mxu0 %v487
        %v815 = vpop.f32.mrf.mxu0
        %v816 = vadd.f32 %v331, %v815
        %v817 = vpop.f32.mrf.mxu0
        %v818 = vpop.f32.mrf.mxu0
        %v819 = vadd.f32 %v331, %v818
        %v820 = vpop.f32.mrf.mxu0
        %821 = vmatprep.mubr.bf16.mxu0 0
        %822 = vmatmul.mubr.bf16.gmra.mxu0 %v488
        %v823 = vpop.f32.mrf.mxu0
        %v824 = vadd.f32 %v331, %v823
        %v825 = vpop.f32.mrf.mxu0
        %v826 = vpop.f32.mrf.mxu0
        %v827 = vadd.f32 %v331, %v826
        %v828 = vpop.f32.mrf.mxu0
        %829 = vmatprep.mubr.bf16.mxu0 0
        %830 = vmatmul.mubr.bf16.gmra.mxu0 %v489
        %v831 = vpop.f32.mrf.mxu0
        %v832 = vadd.f32 %v331, %v831
        %v833 = vpop.f32.mrf.mxu0
        %v834 = vpop.f32.mrf.mxu0
        %v835 = vadd.f32 %v331, %v834
        %v836 = vpop.f32.mrf.mxu0
        %837 = vmatprep.mubr.bf16.mxu0 0
        %838 = vmatmul.mubr.bf16.gmra.mxu0 %v490
        %v839 = vpop.f32.mrf.mxu0
        %v840 = vadd.f32 %v331, %v839
        %v841 = vpop.f32.mrf.mxu0
        %v842 = vpop.f32.mrf.mxu0
        %v843 = vadd.f32 %v331, %v842
        %v844 = vpop.f32.mrf.mxu0
        %845 = vmatprep.mubr.bf16.mxu0 0
        %846 = vmatmul.mubr.bf16.gmra.mxu0 %v491
        %v847 = vpop.f32.mrf.mxu0
        %v848 = vadd.f32 %v331, %v847
        %v849 = vpop.f32.mrf.mxu0
        %v850 = vpop.f32.mrf.mxu0
        %v851 = vadd.f32 %v331, %v850
        %v852 = vpop.f32.mrf.mxu0
        %853 = vmatprep.mubr.bf16.mxu0 0
        %854 = vmatmul.mubr.bf16.gmra.mxu0 %v492
        %v855 = vpop.f32.mrf.mxu0
        %v856 = vadd.f32 %v331, %v855
        %v857 = vpop.f32.mrf.mxu0
        %v858 = vpop.f32.mrf.mxu0
        %v859 = vadd.f32 %v331, %v858
        %v860 = vpop.f32.mrf.mxu0
        %861 = vdwg.mxu0
        %v862 = vmax.f32 %v608, 0.0
        %v863 = vmax.f32 %v611, 0.0
        %v864 = vmax.f32 %v616, 0.0
        %v865 = vmax.f32 %v619, 0.0
        %v866 = vmax.f32 %v624, 0.0
        %v867 = vmax.f32 %v627, 0.0
        %v868 = vmax.f32 %v632, 0.0
        %v869 = vmax.f32 %v635, 0.0
        %v870 = vmax.f32 %v640, 0.0
        %v871 = vmax.f32 %v643, 0.0
        %v872 = vmax.f32 %v648, 0.0
        %v873 = vmax.f32 %v651, 0.0
        %v874 = vmax.f32 %v656, 0.0
        %v875 = vmax.f32 %v659, 0.0
        %v876 = vmax.f32 %v664, 0.0
        %v877 = vmax.f32 %v667, 0.0
        %v878 = vmax.f32 %v672, 0.0
        %v879 = vmax.f32 %v675, 0.0
        %v880 = vmax.f32 %v680, 0.0
        %v881 = vmax.f32 %v683, 0.0
        %v882 = vmax.f32 %v688, 0.0
        %v883 = vmax.f32 %v691, 0.0
        %v884 = vmax.f32 %v696, 0.0
        %v885 = vmax.f32 %v699, 0.0
        %v886 = vmax.f32 %v704, 0.0
        %v887 = vmax.f32 %v707, 0.0
        %v888 = vmax.f32 %v712, 0.0
        %v889 = vmax.f32 %v715, 0.0
        %v890 = vmax.f32 %v720, 0.0
        %v891 = vmax.f32 %v723, 0.0
        %v892 = vmax.f32 %v728, 0.0
        %v893 = vmax.f32 %v731, 0.0
        %v894 = vmax.f32 %v736, 0.0
        %v895 = vmax.f32 %v739, 0.0
        %v896 = vmax.f32 %v744, 0.0
        %v897 = vmax.f32 %v747, 0.0
        %v898 = vmax.f32 %v752, 0.0
        %v899 = vmax.f32 %v755, 0.0
        %v900 = vmax.f32 %v760, 0.0
        %v901 = vmax.f32 %v763, 0.0
        %v902 = vmax.f32 %v768, 0.0
        %v903 = vmax.f32 %v771, 0.0
        %v904 = vmax.f32 %v776, 0.0
        %v905 = vmax.f32 %v779, 0.0
        %v906 = vmax.f32 %v784, 0.0
        %v907 = vmax.f32 %v787, 0.0
        %v908 = vmax.f32 %v792, 0.0
        %v909 = vmax.f32 %v795, 0.0
        %v910 = vmax.f32 %v800, 0.0
        %v911 = vmax.f32 %v803, 0.0
        %v912 = vmax.f32 %v808, 0.0
        %v913 = vmax.f32 %v811, 0.0
        %v914 = vmax.f32 %v816, 0.0
        %v915 = vmax.f32 %v819, 0.0
        %v916 = vmax.f32 %v824, 0.0
        %v917 = vmax.f32 %v827, 0.0
        %v918 = vmax.f32 %v832, 0.0
        %v919 = vmax.f32 %v835, 0.0
        %v920 = vmax.f32 %v840, 0.0
        %v921 = vmax.f32 %v843, 0.0
        %v922 = vmax.f32 %v848, 0.0
        %v923 = vmax.f32 %v851, 0.0
        %v924 = vmax.f32 %v856, 0.0
        %v925 = vmax.f32 %v859, 0.0
        %v926 = vpack.c.bf16 %v863, %v862
        %v927 = vpack.c.bf16 %v865, %v864
        %v928 = vpack.c.bf16 %v867, %v866
        %v929 = vpack.c.bf16 %v869, %v868
        %v930 = vpack.c.bf16 %v871, %v870
        %v931 = vpack.c.bf16 %v873, %v872
        %v932 = vpack.c.bf16 %v875, %v874
        %v933 = vpack.c.bf16 %v877, %v876
        %v934 = vpack.c.bf16 %v879, %v878
        %v935 = vpack.c.bf16 %v881, %v880
        %v936 = vpack.c.bf16 %v883, %v882
        %v937 = vpack.c.bf16 %v885, %v884
        %v938 = vpack.c.bf16 %v887, %v886
        %v939 = vpack.c.bf16 %v889, %v888
        %v940 = vpack.c.bf16 %v891, %v890
        %v941 = vpack.c.bf16 %v893, %v892
        %v942 = vpack.c.bf16 %v895, %v894
        %v943 = vpack.c.bf16 %v897, %v896
        %v944 = vpack.c.bf16 %v899, %v898
        %v945 = vpack.c.bf16 %v901, %v900
        %v946 = vpack.c.bf16 %v903, %v902
        %v947 = vpack.c.bf16 %v905, %v904
        %v948 = vpack.c.bf16 %v907, %v906
        %v949 = vpack.c.bf16 %v909, %v908
        %v950 = vpack.c.bf16 %v911, %v910
        %v951 = vpack.c.bf16 %v913, %v912
        %v952 = vpack.c.bf16 %v915, %v914
        %v953 = vpack.c.bf16 %v917, %v916
        %v954 = vpack.c.bf16 %v919, %v918
        %v955 = vpack.c.bf16 %v921, %v920
        %v956 = vpack.c.bf16 %v923, %v922
        %v957 = vpack.c.bf16 %v925, %v924
        %v958 = vld [vmem:[%s3] sm:$0xf]
        %v959 = vld [vmem:[%s3 + $0x4] sm:$0xf]
        %v960 = vld [vmem:[%s3 + $0x8] sm:$0xf]
        %v961 = vld [vmem:[%s3 + $0xc] sm:$0xf]
        %v962 = vld [vmem:[%s4] sm:$0x1]
        %v964 = vlaneseq
        %v965 = vshrl.u32 %v964, 7
        %v966 = vsub.s32 0, %v965
        %v967 = vrot.slane %v962, %v966
        %v973 = vunpack.c.l.b16 %v958
        %v974 = vunpack.c.l.b16 %v959
        %v975 = vunpack.c.l.b16 %v960
        %v976 = vunpack.c.l.b16 %v961
        %v977 = vpack.c.b16 %v974, %v973
        %v978 = vpack.c.b16 %v976, %v975
        %vm981 = vcmask 261120
        %v983 = vsel %vm981, %v926, 0
        %v986 = vsel %vm981, %v927, 0
        %v989 = vsel %vm981, %v928, 0
        %v992 = vsel %vm981, %v929, 0
        %v995 = vsel %vm981, %v930, 0
        %v998 = vsel %vm981, %v931, 0
        %v1001 = vsel %vm981, %v932, 0
        %v1004 = vsel %vm981, %v933, 0
        %v1007 = vsel %vm981, %v934, 0
        %v1010 = vsel %vm981, %v935, 0
        %v1013 = vsel %vm981, %v936, 0
        %v1016 = vsel %vm981, %v937, 0
        %v1019 = vsel %vm981, %v938, 0
        %v1022 = vsel %vm981, %v939, 0
        %v1025 = vsel %vm981, %v940, 0
        %v1028 = vsel %vm981, %v941, 0
        %v1031 = vsel %vm981, %v942, 0
        %v1034 = vsel %vm981, %v943, 0
        %v1037 = vsel %vm981, %v944, 0
        %v1040 = vsel %vm981, %v945, 0
        %v1043 = vsel %vm981, %v946, 0
        %v1046 = vsel %vm981, %v947, 0
        %v1049 = vsel %vm981, %v948, 0
        %v1052 = vsel %vm981, %v949, 0
        %v1055 = vsel %vm981, %v950, 0
        %v1058 = vsel %vm981, %v951, 0
        %v1061 = vsel %vm981, %v952, 0
        %v1064 = vsel %vm981, %v953, 0
        %v1067 = vsel %vm981, %v954, 0
        %v1070 = vsel %vm981, %v955, 0
        %v1073 = vsel %vm981, %v956, 0
        %v1076 = vsel %vm981, %v957, 0
        %1078 = vmatprep.subr.bf16.mxu0 0
        %1079 = vmatpush1.bf16.msra.mxu0 0
        %1080 = vmatprep.subr.bf16.mxu0 0
        %1081 = vmatpush1.bf16.msra.mxu0 0
        %1082 = vmatprep.subr.bf16.mxu0 0
        %1083 = vmatpush1.bf16.msra.mxu0 0
        %1084 = vmatprep.subr.bf16.mxu0 0
        %1085 = vmatpush1.bf16.msra.mxu0 0
        %1086 = vmatprep.subr.bf16.mxu0 0
        %1087 = vmatpush1.bf16.msra.mxu0 0
        %1088 = vmatprep.subr.bf16.mxu0 0
        %1089 = vmatpush1.bf16.msra.mxu0 0
        %1090 = vmatprep.subr.bf16.mxu0 0
        %1091 = vmatpush1.bf16.msra.mxu0 %v978
        %1092 = vmatprep.subr.bf16.mxu0 0
        %1093 = vmatpush1.bf16.msra.mxu0 %v977
        %1094 = vmatprep.subr.bf16.mxu0 0
        %1095 = vmatpush2.bf16.msra.mxu0 0
        %1096 = vmatprep.subr.bf16.mxu0 0
        %1097 = vmatpush2.bf16.msra.mxu0 0
        %1098 = vmatprep.subr.bf16.mxu0 0
        %1099 = vmatpush2.bf16.msra.mxu0 0
        %1100 = vmatprep.subr.bf16.mxu0 0
        %1101 = vmatpush2.bf16.msra.mxu0 0
        %1102 = vmatprep.subr.bf16.mxu0 0
        %1103 = vmatpush2.bf16.msra.mxu0 0
        %1104 = vmatprep.subr.bf16.mxu0 0
        %1105 = vmatpush2.bf16.msra.mxu0 0
        %1106 = vmatprep.subr.bf16.mxu0 0
        %1107 = vmatpush2.bf16.msra.mxu0 0
        %1108 = vmatprep.subr.bf16.mxu0 0
        %1109 = vmatpush2.bf16.msra.mxu0 0
        %1110 = vmatprep.mubr.bf16.mxu0 0
        %1111 = vmatmul.mubr.bf16.gmra.mxu0 %v983
        %v1112 = vpop.f32.mrf.mxu0
        %v1113 = vadd.f32 %v967, %v1112
        %v1114 = vpop.f32.mrf.mxu0
        %v1115 = vpop.f32.mrf.mxu0
        %v1116 = vadd.f32 %v967, %v1115
        %v1117 = vpop.f32.mrf.mxu0
        %1118 = vmatprep.mubr.bf16.mxu0 0
        %1119 = vmatmul.mubr.bf16.gmra.mxu0 %v986
        %v1120 = vpop.f32.mrf.mxu0
        %v1121 = vadd.f32 %v967, %v1120
        %v1122 = vpop.f32.mrf.mxu0
        %v1123 = vpop.f32.mrf.mxu0
        %v1124 = vadd.f32 %v967, %v1123
        %v1125 = vpop.f32.mrf.mxu0
        %1126 = vmatprep.mubr.bf16.mxu0 0
        %1127 = vmatmul.mubr.bf16.gmra.mxu0 %v989
        %v1128 = vpop.f32.mrf.mxu0
        %v1129 = vadd.f32 %v967, %v1128
        %v1130 = vpop.f32.mrf.mxu0
        %v1131 = vpop.f32.mrf.mxu0
        %v1132 = vadd.f32 %v967, %v1131
        %v1133 = vpop.f32.mrf.mxu0
        %1134 = vmatprep.mubr.bf16.mxu0 0
        %1135 = vmatmul.mubr.bf16.gmra.mxu0 %v992
        %v1136 = vpop.f32.mrf.mxu0
        %v1137 = vadd.f32 %v967, %v1136
        %v1138 = vpop.f32.mrf.mxu0
        %v1139 = vpop.f32.mrf.mxu0
        %v1140 = vadd.f32 %v967, %v1139
        %v1141 = vpop.f32.mrf.mxu0
        %1142 = vmatprep.mubr.bf16.mxu0 0
        %1143 = vmatmul.mubr.bf16.gmra.mxu0 %v995
        %v1144 = vpop.f32.mrf.mxu0
        %v1145 = vadd.f32 %v967, %v1144
        %v1146 = vpop.f32.mrf.mxu0
        %v1147 = vpop.f32.mrf.mxu0
        %v1148 = vadd.f32 %v967, %v1147
        %v1149 = vpop.f32.mrf.mxu0
        %1150 = vmatprep.mubr.bf16.mxu0 0
        %1151 = vmatmul.mubr.bf16.gmra.mxu0 %v998
        %v1152 = vpop.f32.mrf.mxu0
        %v1153 = vadd.f32 %v967, %v1152
        %v1154 = vpop.f32.mrf.mxu0
        %v1155 = vpop.f32.mrf.mxu0
        %v1156 = vadd.f32 %v967, %v1155
        %v1157 = vpop.f32.mrf.mxu0
        %1158 = vmatprep.mubr.bf16.mxu0 0
        %1159 = vmatmul.mubr.bf16.gmra.mxu0 %v1001
        %v1160 = vpop.f32.mrf.mxu0
        %v1161 = vadd.f32 %v967, %v1160
        %v1162 = vpop.f32.mrf.mxu0
        %v1163 = vpop.f32.mrf.mxu0
        %v1164 = vadd.f32 %v967, %v1163
        %v1165 = vpop.f32.mrf.mxu0
        %1166 = vmatprep.mubr.bf16.mxu0 0
        %1167 = vmatmul.mubr.bf16.gmra.mxu0 %v1004
        %v1168 = vpop.f32.mrf.mxu0
        %v1169 = vadd.f32 %v967, %v1168
        %v1170 = vpop.f32.mrf.mxu0
        %v1171 = vpop.f32.mrf.mxu0
        %v1172 = vadd.f32 %v967, %v1171
        %v1173 = vpop.f32.mrf.mxu0
        %1174 = vmatprep.mubr.bf16.mxu0 0
        %1175 = vmatmul.mubr.bf16.gmra.mxu0 %v1007
        %v1176 = vpop.f32.mrf.mxu0
        %v1177 = vadd.f32 %v967, %v1176
        %v1178 = vpop.f32.mrf.mxu0
        %v1179 = vpop.f32.mrf.mxu0
        %v1180 = vadd.f32 %v967, %v1179
        %v1181 = vpop.f32.mrf.mxu0
        %1182 = vmatprep.mubr.bf16.mxu0 0
        %1183 = vmatmul.mubr.bf16.gmra.mxu0 %v1010
        %v1184 = vpop.f32.mrf.mxu0
        %v1185 = vadd.f32 %v967, %v1184
        %v1186 = vpop.f32.mrf.mxu0
        %v1187 = vpop.f32.mrf.mxu0
        %v1188 = vadd.f32 %v967, %v1187
        %v1189 = vpop.f32.mrf.mxu0
        %1190 = vmatprep.mubr.bf16.mxu0 0
        %1191 = vmatmul.mubr.bf16.gmra.mxu0 %v1013
        %v1192 = vpop.f32.mrf.mxu0
        %v1193 = vadd.f32 %v967, %v1192
        %v1194 = vpop.f32.mrf.mxu0
        %v1195 = vpop.f32.mrf.mxu0
        %v1196 = vadd.f32 %v967, %v1195
        %v1197 = vpop.f32.mrf.mxu0
        %1198 = vmatprep.mubr.bf16.mxu0 0
        %1199 = vmatmul.mubr.bf16.gmra.mxu0 %v1016
        %v1200 = vpop.f32.mrf.mxu0
        %v1201 = vadd.f32 %v967, %v1200
        %v1202 = vpop.f32.mrf.mxu0
        %v1203 = vpop.f32.mrf.mxu0
        %v1204 = vadd.f32 %v967, %v1203
        %v1205 = vpop.f32.mrf.mxu0
        %1206 = vmatprep.mubr.bf16.mxu0 0
        %1207 = vmatmul.mubr.bf16.gmra.mxu0 %v1019
        %v1208 = vpop.f32.mrf.mxu0
        %v1209 = vadd.f32 %v967, %v1208
        %v1210 = vpop.f32.mrf.mxu0
        %v1211 = vpop.f32.mrf.mxu0
        %v1212 = vadd.f32 %v967, %v1211
        %v1213 = vpop.f32.mrf.mxu0
        %1214 = vmatprep.mubr.bf16.mxu0 0
        %1215 = vmatmul.mubr.bf16.gmra.mxu0 %v1022
        %v1216 = vpop.f32.mrf.mxu0
        %v1217 = vadd.f32 %v967, %v1216
        %v1218 = vpop.f32.mrf.mxu0
        %v1219 = vpop.f32.mrf.mxu0
        %v1220 = vadd.f32 %v967, %v1219
        %v1221 = vpop.f32.mrf.mxu0
        %1222 = vmatprep.mubr.bf16.mxu0 0
        %1223 = vmatmul.mubr.bf16.gmra.mxu0 %v1025
        %v1224 = vpop.f32.mrf.mxu0
        %v1225 = vadd.f32 %v967, %v1224
        %v1226 = vpop.f32.mrf.mxu0
        %v1227 = vpop.f32.mrf.mxu0
        %v1228 = vadd.f32 %v967, %v1227
        %v1229 = vpop.f32.mrf.mxu0
        %1230 = vmatprep.mubr.bf16.mxu0 0
        %1231 = vmatmul.mubr.bf16.gmra.mxu0 %v1028
        %v1232 = vpop.f32.mrf.mxu0
        %v1233 = vadd.f32 %v967, %v1232
        %v1234 = vpop.f32.mrf.mxu0
        %v1235 = vpop.f32.mrf.mxu0
        %v1236 = vadd.f32 %v967, %v1235
        %v1237 = vpop.f32.mrf.mxu0
        %1238 = vmatprep.mubr.bf16.mxu0 0
        %1239 = vmatmul.mubr.bf16.gmra.mxu0 %v1031
        %v1240 = vpop.f32.mrf.mxu0
        %v1241 = vadd.f32 %v967, %v1240
        %v1242 = vpop.f32.mrf.mxu0
        %v1243 = vpop.f32.mrf.mxu0
        %v1244 = vadd.f32 %v967, %v1243
        %v1245 = vpop.f32.mrf.mxu0
        %1246 = vmatprep.mubr.bf16.mxu0 0
        %1247 = vmatmul.mubr.bf16.gmra.mxu0 %v1034
        %v1248 = vpop.f32.mrf.mxu0
        %v1249 = vadd.f32 %v967, %v1248
        %v1250 = vpop.f32.mrf.mxu0
        %v1251 = vpop.f32.mrf.mxu0
        %v1252 = vadd.f32 %v967, %v1251
        %v1253 = vpop.f32.mrf.mxu0
        %1254 = vmatprep.mubr.bf16.mxu0 0
        %1255 = vmatmul.mubr.bf16.gmra.mxu0 %v1037
        %v1256 = vpop.f32.mrf.mxu0
        %v1257 = vadd.f32 %v967, %v1256
        %v1258 = vpop.f32.mrf.mxu0
        %v1259 = vpop.f32.mrf.mxu0
        %v1260 = vadd.f32 %v967, %v1259
        %v1261 = vpop.f32.mrf.mxu0
        %1262 = vmatprep.mubr.bf16.mxu0 0
        %1263 = vmatmul.mubr.bf16.gmra.mxu0 %v1040
        %v1264 = vpop.f32.mrf.mxu0
        %v1265 = vadd.f32 %v967, %v1264
        %v1266 = vpop.f32.mrf.mxu0
        %v1267 = vpop.f32.mrf.mxu0
        %v1268 = vadd.f32 %v967, %v1267
        %v1269 = vpop.f32.mrf.mxu0
        %1270 = vmatprep.mubr.bf16.mxu0 0
        %1271 = vmatmul.mubr.bf16.gmra.mxu0 %v1043
        %v1272 = vpop.f32.mrf.mxu0
        %v1273 = vadd.f32 %v967, %v1272
        %v1274 = vpop.f32.mrf.mxu0
        %v1275 = vpop.f32.mrf.mxu0
        %v1276 = vadd.f32 %v967, %v1275
        %v1277 = vpop.f32.mrf.mxu0
        %1278 = vmatprep.mubr.bf16.mxu0 0
        %1279 = vmatmul.mubr.bf16.gmra.mxu0 %v1046
        %v1280 = vpop.f32.mrf.mxu0
        %v1281 = vadd.f32 %v967, %v1280
        %v1282 = vpop.f32.mrf.mxu0
        %v1283 = vpop.f32.mrf.mxu0
        %v1284 = vadd.f32 %v967, %v1283
        %v1285 = vpop.f32.mrf.mxu0
        %1286 = vmatprep.mubr.bf16.mxu0 0
        %1287 = vmatmul.mubr.bf16.gmra.mxu0 %v1049
        %v1288 = vpop.f32.mrf.mxu0
        %v1289 = vadd.f32 %v967, %v1288
        %v1290 = vpop.f32.mrf.mxu0
        %v1291 = vpop.f32.mrf.mxu0
        %v1292 = vadd.f32 %v967, %v1291
        %v1293 = vpop.f32.mrf.mxu0
        %1294 = vmatprep.mubr.bf16.mxu0 0
        %1295 = vmatmul.mubr.bf16.gmra.mxu0 %v1052
        %v1296 = vpop.f32.mrf.mxu0
        %v1297 = vadd.f32 %v967, %v1296
        %v1298 = vpop.f32.mrf.mxu0
        %v1299 = vpop.f32.mrf.mxu0
        %v1300 = vadd.f32 %v967, %v1299
        %v1301 = vpop.f32.mrf.mxu0
        %1302 = vmatprep.mubr.bf16.mxu0 0
        %1303 = vmatmul.mubr.bf16.gmra.mxu0 %v1055
        %v1304 = vpop.f32.mrf.mxu0
        %v1305 = vadd.f32 %v967, %v1304
        %v1306 = vpop.f32.mrf.mxu0
        %v1307 = vpop.f32.mrf.mxu0
        %v1308 = vadd.f32 %v967, %v1307
        %v1309 = vpop.f32.mrf.mxu0
        %1310 = vmatprep.mubr.bf16.mxu0 0
        %1311 = vmatmul.mubr.bf16.gmra.mxu0 %v1058
        %v1312 = vpop.f32.mrf.mxu0
        %v1313 = vadd.f32 %v967, %v1312
        %v1314 = vpop.f32.mrf.mxu0
        %v1315 = vpop.f32.mrf.mxu0
        %v1316 = vadd.f32 %v967, %v1315
        %v1317 = vpop.f32.mrf.mxu0
        %1318 = vmatprep.mubr.bf16.mxu0 0
        %1319 = vmatmul.mubr.bf16.gmra.mxu0 %v1061
        %v1320 = vpop.f32.mrf.mxu0
        %v1321 = vadd.f32 %v967, %v1320
        %v1322 = vpop.f32.mrf.mxu0
        %v1323 = vpop.f32.mrf.mxu0
        %v1324 = vadd.f32 %v967, %v1323
        %v1325 = vpop.f32.mrf.mxu0
        %1326 = vmatprep.mubr.bf16.mxu0 0
        %1327 = vmatmul.mubr.bf16.gmra.mxu0 %v1064
        %v1328 = vpop.f32.mrf.mxu0
        %v1329 = vadd.f32 %v967, %v1328
        %v1330 = vpop.f32.mrf.mxu0
        %v1331 = vpop.f32.mrf.mxu0
        %v1332 = vadd.f32 %v967, %v1331
        %v1333 = vpop.f32.mrf.mxu0
        %1334 = vmatprep.mubr.bf16.mxu0 0
        %1335 = vmatmul.mubr.bf16.gmra.mxu0 %v1067
        %v1336 = vpop.f32.mrf.mxu0
        %v1337 = vadd.f32 %v967, %v1336
        %v1338 = vpop.f32.mrf.mxu0
        %v1339 = vpop.f32.mrf.mxu0
        %v1340 = vadd.f32 %v967, %v1339
        %v1341 = vpop.f32.mrf.mxu0
        %1342 = vmatprep.mubr.bf16.mxu0 0
        %1343 = vmatmul.mubr.bf16.gmra.mxu0 %v1070
        %v1344 = vpop.f32.mrf.mxu0
        %v1345 = vadd.f32 %v967, %v1344
        %v1346 = vpop.f32.mrf.mxu0
        %v1347 = vpop.f32.mrf.mxu0
        %v1348 = vadd.f32 %v967, %v1347
        %v1349 = vpop.f32.mrf.mxu0
        %1350 = vmatprep.mubr.bf16.mxu0 0
        %1351 = vmatmul.mubr.bf16.gmra.mxu0 %v1073
        %v1352 = vpop.f32.mrf.mxu0
        %v1353 = vadd.f32 %v967, %v1352
        %v1354 = vpop.f32.mrf.mxu0
        %v1355 = vpop.f32.mrf.mxu0
        %v1356 = vadd.f32 %v967, %v1355
        %v1357 = vpop.f32.mrf.mxu0
        %1358 = vmatprep.mubr.bf16.mxu0 0
        %1359 = vmatmul.mubr.bf16.gmra.mxu0 %v1076
        %v1360 = vpop.f32.mrf.mxu0
        %v1361 = vadd.f32 %v967, %v1360
        %v1362 = vpop.f32.mrf.mxu0
        %v1363 = vpop.f32.mrf.mxu0
        %v1364 = vadd.f32 %v967, %v1363
        %v1365 = vpop.f32.mrf.mxu0
        %1366 = vdwg.mxu0
        %1431 = vrot.lane.b32.xlu0 %v1113, 125
        %v1432 = vpop.permute.xlu0 %1431
        %1433 = vrot.lane.b32.xlu0 %v1116, 125
        %v1434 = vpop.permute.xlu0 %1433
        %1435 = vrot.lane.b32.xlu0 %v1121, 125
        %v1436 = vpop.permute.xlu0 %1435
        %1437 = vrot.lane.b32.xlu0 %v1124, 125
        %v1438 = vpop.permute.xlu0 %1437
        %1439 = vrot.lane.b32.xlu0 %v1129, 125
        %v1440 = vpop.permute.xlu0 %1439
        %1441 = vrot.lane.b32.xlu0 %v1132, 125
        %v1442 = vpop.permute.xlu0 %1441
        %1443 = vrot.lane.b32.xlu0 %v1137, 125
        %v1444 = vpop.permute.xlu0 %1443
        %1445 = vrot.lane.b32.xlu0 %v1140, 125
        %v1446 = vpop.permute.xlu0 %1445
        %1447 = vrot.lane.b32.xlu0 %v1145, 125
        %v1448 = vpop.permute.xlu0 %1447
        %1449 = vrot.lane.b32.xlu0 %v1148, 125
        %v1450 = vpop.permute.xlu0 %1449
        %1451 = vrot.lane.b32.xlu0 %v1153, 125
        %v1452 = vpop.permute.xlu0 %1451
        %1453 = vrot.lane.b32.xlu0 %v1156, 125
        %v1454 = vpop.permute.xlu0 %1453
        %1455 = vrot.lane.b32.xlu0 %v1161, 125
        %v1456 = vpop.permute.xlu0 %1455
        %1457 = vrot.lane.b32.xlu0 %v1164, 125
        %v1458 = vpop.permute.xlu0 %1457
        %1459 = vrot.lane.b32.xlu0 %v1169, 125
        %v1460 = vpop.permute.xlu0 %1459
        %1461 = vrot.lane.b32.xlu0 %v1172, 125
        %v1462 = vpop.permute.xlu0 %1461
        %1463 = vrot.lane.b32.xlu0 %v1177, 125
        %v1464 = vpop.permute.xlu0 %1463
        %1465 = vrot.lane.b32.xlu0 %v1180, 125
        %v1466 = vpop.permute.xlu0 %1465
        %1467 = vrot.lane.b32.xlu0 %v1185, 125
        %v1468 = vpop.permute.xlu0 %1467
        %1469 = vrot.lane.b32.xlu0 %v1188, 125
        %v1470 = vpop.permute.xlu0 %1469
        %1471 = vrot.lane.b32.xlu0 %v1193, 125
        %v1472 = vpop.permute.xlu0 %1471
        %1473 = vrot.lane.b32.xlu0 %v1196, 125
        %v1474 = vpop.permute.xlu0 %1473
        %1475 = vrot.lane.b32.xlu0 %v1201, 125
        %v1476 = vpop.permute.xlu0 %1475
        %1477 = vrot.lane.b32.xlu0 %v1204, 125
        %v1478 = vpop.permute.xlu0 %1477
        %1479 = vrot.lane.b32.xlu0 %v1209, 125
        %v1480 = vpop.permute.xlu0 %1479
        %1481 = vrot.lane.b32.xlu0 %v1212, 125
        %v1482 = vpop.permute.xlu0 %1481
        %1483 = vrot.lane.b32.xlu0 %v1217, 125
        %v1484 = vpop.permute.xlu0 %1483
        %1485 = vrot.lane.b32.xlu0 %v1220, 125
        %v1486 = vpop.permute.xlu0 %1485
        %1487 = vrot.lane.b32.xlu0 %v1225, 125
        %v1488 = vpop.permute.xlu0 %1487
        %1489 = vrot.lane.b32.xlu0 %v1228, 125
        %v1490 = vpop.permute.xlu0 %1489
        %1491 = vrot.lane.b32.xlu0 %v1233, 125
        %v1492 = vpop.permute.xlu0 %1491
        %1493 = vrot.lane.b32.xlu0 %v1236, 125
        %v1494 = vpop.permute.xlu0 %1493
        %1495 = vrot.lane.b32.xlu0 %v1241, 125
        %v1496 = vpop.permute.xlu0 %1495
        %1497 = vrot.lane.b32.xlu0 %v1244, 125
        %v1498 = vpop.permute.xlu0 %1497
        %1499 = vrot.lane.b32.xlu0 %v1249, 125
        %v1500 = vpop.permute.xlu0 %1499
        %1501 = vrot.lane.b32.xlu0 %v1252, 125
        %v1502 = vpop.permute.xlu0 %1501
        %1503 = vrot.lane.b32.xlu0 %v1257, 125
        %v1504 = vpop.permute.xlu0 %1503
        %1505 = vrot.lane.b32.xlu0 %v1260, 125
        %v1506 = vpop.permute.xlu0 %1505
        %1507 = vrot.lane.b32.xlu0 %v1265, 125
        %v1508 = vpop.permute.xlu0 %1507
        %1509 = vrot.lane.b32.xlu0 %v1268, 125
        %v1510 = vpop.permute.xlu0 %1509
        %1511 = vrot.lane.b32.xlu0 %v1273, 125
        %v1512 = vpop.permute.xlu0 %1511
        %1513 = vrot.lane.b32.xlu0 %v1276, 125
        %v1514 = vpop.permute.xlu0 %1513
        %1515 = vrot.lane.b32.xlu0 %v1281, 125
        %v1516 = vpop.permute.xlu0 %1515
        %1517 = vrot.lane.b32.xlu0 %v1284, 125
        %v1518 = vpop.permute.xlu0 %1517
        %1519 = vrot.lane.b32.xlu0 %v1289, 125
        %v1520 = vpop.permute.xlu0 %1519
        %1521 = vrot.lane.b32.xlu0 %v1292, 125
        %v1522 = vpop.permute.xlu0 %1521
        %1523 = vrot.lane.b32.xlu0 %v1297, 125
        %v1524 = vpop.permute.xlu0 %1523
        %1525 = vrot.lane.b32.xlu0 %v1300, 125
        %v1526 = vpop.permute.xlu0 %1525
        %1527 = vrot.lane.b32.xlu0 %v1305, 125
        %v1528 = vpop.permute.xlu0 %1527
        %1529 = vrot.lane.b32.xlu0 %v1308, 125
        %v1530 = vpop.permute.xlu0 %1529
        %1531 = vrot.lane.b32.xlu0 %v1313, 125
        %v1532 = vpop.permute.xlu0 %1531
        %1533 = vrot.lane.b32.xlu0 %v1316, 125
        %v1534 = vpop.permute.xlu0 %1533
        %1535 = vrot.lane.b32.xlu0 %v1321, 125
        %v1536 = vpop.permute.xlu0 %1535
        %1537 = vrot.lane.b32.xlu0 %v1324, 125
        %v1538 = vpop.permute.xlu0 %1537
        %1539 = vrot.lane.b32.xlu0 %v1329, 125
        %v1540 = vpop.permute.xlu0 %1539
        %1541 = vrot.lane.b32.xlu0 %v1332, 125
        %v1542 = vpop.permute.xlu0 %1541
        %1543 = vrot.lane.b32.xlu0 %v1337, 125
        %v1544 = vpop.permute.xlu0 %1543
        %1545 = vrot.lane.b32.xlu0 %v1340, 125
        %v1546 = vpop.permute.xlu0 %1545
        %1547 = vrot.lane.b32.xlu0 %v1345, 125
        %v1548 = vpop.permute.xlu0 %1547
        %1549 = vrot.lane.b32.xlu0 %v1348, 125
        %v1550 = vpop.permute.xlu0 %1549
        %1551 = vrot.lane.b32.xlu0 %v1353, 125
        %v1552 = vpop.permute.xlu0 %1551
        %1553 = vrot.lane.b32.xlu0 %v1356, 125
        %v1554 = vpop.permute.xlu0 %1553
        %1555 = vrot.lane.b32.xlu0 %v1361, 125
        %v1556 = vpop.permute.xlu0 %1555
        %1557 = vrot.lane.b32.xlu0 %v1364, 125
        %v1558 = vpop.permute.xlu0 %1557
        %v1623 = vmax.f32 %v1113, %v1432
        %v1624 = vmax.f32 %v1116, %v1434
        %v1625 = vmax.f32 %v1121, %v1436
        %v1626 = vmax.f32 %v1124, %v1438
        %v1627 = vmax.f32 %v1129, %v1440
        %v1628 = vmax.f32 %v1132, %v1442
        %v1629 = vmax.f32 %v1137, %v1444
        %v1630 = vmax.f32 %v1140, %v1446
        %v1631 = vmax.f32 %v1145, %v1448
        %v1632 = vmax.f32 %v1148, %v1450
        %v1633 = vmax.f32 %v1153, %v1452
        %v1634 = vmax.f32 %v1156, %v1454
        %v1635 = vmax.f32 %v1161, %v1456
        %v1636 = vmax.f32 %v1164, %v1458
        %v1637 = vmax.f32 %v1169, %v1460
        %v1638 = vmax.f32 %v1172, %v1462
        %v1639 = vmax.f32 %v1177, %v1464
        %v1640 = vmax.f32 %v1180, %v1466
        %v1641 = vmax.f32 %v1185, %v1468
        %v1642 = vmax.f32 %v1188, %v1470
        %v1643 = vmax.f32 %v1193, %v1472
        %v1644 = vmax.f32 %v1196, %v1474
        %v1645 = vmax.f32 %v1201, %v1476
        %v1646 = vmax.f32 %v1204, %v1478
        %v1647 = vmax.f32 %v1209, %v1480
        %v1648 = vmax.f32 %v1212, %v1482
        %v1649 = vmax.f32 %v1217, %v1484
        %v1650 = vmax.f32 %v1220, %v1486
        %v1651 = vmax.f32 %v1225, %v1488
        %v1652 = vmax.f32 %v1228, %v1490
        %v1653 = vmax.f32 %v1233, %v1492
        %v1654 = vmax.f32 %v1236, %v1494
        %v1655 = vmax.f32 %v1241, %v1496
        %v1656 = vmax.f32 %v1244, %v1498
        %v1657 = vmax.f32 %v1249, %v1500
        %v1658 = vmax.f32 %v1252, %v1502
        %v1659 = vmax.f32 %v1257, %v1504
        %v1660 = vmax.f32 %v1260, %v1506
        %v1661 = vmax.f32 %v1265, %v1508
        %v1662 = vmax.f32 %v1268, %v1510
        %v1663 = vmax.f32 %v1273, %v1512
        %v1664 = vmax.f32 %v1276, %v1514
        %v1665 = vmax.f32 %v1281, %v1516
        %v1666 = vmax.f32 %v1284, %v1518
        %v1667 = vmax.f32 %v1289, %v1520
        %v1668 = vmax.f32 %v1292, %v1522
        %v1669 = vmax.f32 %v1297, %v1524
        %v1670 = vmax.f32 %v1300, %v1526
        %v1671 = vmax.f32 %v1305, %v1528
        %v1672 = vmax.f32 %v1308, %v1530
        %v1673 = vmax.f32 %v1313, %v1532
        %v1674 = vmax.f32 %v1316, %v1534
        %v1675 = vmax.f32 %v1321, %v1536
        %v1676 = vmax.f32 %v1324, %v1538
        %v1677 = vmax.f32 %v1329, %v1540
        %v1678 = vmax.f32 %v1332, %v1542
        %v1679 = vmax.f32 %v1337, %v1544
        %v1680 = vmax.f32 %v1340, %v1546
        %v1681 = vmax.f32 %v1345, %v1548
        %v1682 = vmax.f32 %v1348, %v1550
        %v1683 = vmax.f32 %v1353, %v1552
        %v1684 = vmax.f32 %v1356, %v1554
        %v1685 = vmax.f32 %v1361, %v1556
        %v1686 = vmax.f32 %v1364, %v1558
        %v1687 = vsub.f32 %v1113, %v1623
        %v1688 = vsub.f32 %v1116, %v1624
        %v1689 = vsub.f32 %v1121, %v1625
        %v1690 = vsub.f32 %v1124, %v1626
        %v1691 = vsub.f32 %v1129, %v1627
        %v1692 = vsub.f32 %v1132, %v1628
        %v1693 = vsub.f32 %v1137, %v1629
        %v1694 = vsub.f32 %v1140, %v1630
        %v1695 = vsub.f32 %v1145, %v1631
        %v1696 = vsub.f32 %v1148, %v1632
        %v1697 = vsub.f32 %v1153, %v1633
        %v1698 = vsub.f32 %v1156, %v1634
        %v1699 = vsub.f32 %v1161, %v1635
        %v1700 = vsub.f32 %v1164, %v1636
        %v1701 = vsub.f32 %v1169, %v1637
        %v1702 = vsub.f32 %v1172, %v1638
        %v1703 = vsub.f32 %v1177, %v1639
        %v1704 = vsub.f32 %v1180, %v1640
        %v1705 = vsub.f32 %v1185, %v1641
        %v1706 = vsub.f32 %v1188, %v1642
        %v1707 = vsub.f32 %v1193, %v1643
        %v1708 = vsub.f32 %v1196, %v1644
        %v1709 = vsub.f32 %v1201, %v1645
        %v1710 = vsub.f32 %v1204, %v1646
        %v1711 = vsub.f32 %v1209, %v1647
        %v1712 = vsub.f32 %v1212, %v1648
        %v1713 = vsub.f32 %v1217, %v1649
        %v1714 = vsub.f32 %v1220, %v1650
        %v1715 = vsub.f32 %v1225, %v1651
        %v1716 = vsub.f32 %v1228, %v1652
        %v1717 = vsub.f32 %v1233, %v1653
        %v1718 = vsub.f32 %v1236, %v1654
        %v1719 = vsub.f32 %v1241, %v1655
        %v1720 = vsub.f32 %v1244, %v1656
        %v1721 = vsub.f32 %v1249, %v1657
        %v1722 = vsub.f32 %v1252, %v1658
        %v1723 = vsub.f32 %v1257, %v1659
        %v1724 = vsub.f32 %v1260, %v1660
        %v1725 = vsub.f32 %v1265, %v1661
        %v1726 = vsub.f32 %v1268, %v1662
        %v1727 = vsub.f32 %v1273, %v1663
        %v1728 = vsub.f32 %v1276, %v1664
        %v1729 = vsub.f32 %v1281, %v1665
        %v1730 = vsub.f32 %v1284, %v1666
        %v1731 = vsub.f32 %v1289, %v1667
        %v1732 = vsub.f32 %v1292, %v1668
        %v1733 = vsub.f32 %v1297, %v1669
        %v1734 = vsub.f32 %v1300, %v1670
        %v1735 = vsub.f32 %v1305, %v1671
        %v1736 = vsub.f32 %v1308, %v1672
        %v1737 = vsub.f32 %v1313, %v1673
        %v1738 = vsub.f32 %v1316, %v1674
        %v1739 = vsub.f32 %v1321, %v1675
        %v1740 = vsub.f32 %v1324, %v1676
        %v1741 = vsub.f32 %v1329, %v1677
        %v1742 = vsub.f32 %v1332, %v1678
        %v1743 = vsub.f32 %v1337, %v1679
        %v1744 = vsub.f32 %v1340, %v1680
        %v1745 = vsub.f32 %v1345, %v1681
        %v1746 = vsub.f32 %v1348, %v1682
        %v1747 = vsub.f32 %v1353, %v1683
        %v1748 = vsub.f32 %v1356, %v1684
        %v1749 = vsub.f32 %v1361, %v1685
        %v1750 = vsub.f32 %v1364, %v1686
        %v1751 = vmul.f32 %v1687, 1.442695
        %v1752 = vpow.pop %v1751
        %v1753 = vmul.f32 %v1688, 1.442695
        %v1754 = vpow.pop %v1753
        %v1755 = vmul.f32 %v1689, 1.442695
        %v1756 = vpow.pop %v1755
        %v1757 = vmul.f32 %v1690, 1.442695
        %v1758 = vpow.pop %v1757
        %v1759 = vmul.f32 %v1691, 1.442695
        %v1760 = vpow.pop %v1759
        %v1761 = vmul.f32 %v1692, 1.442695
        %v1762 = vpow.pop %v1761
        %v1763 = vmul.f32 %v1693, 1.442695
        %v1764 = vpow.pop %v1763
        %v1765 = vmul.f32 %v1694, 1.442695
        %v1766 = vpow.pop %v1765
        %v1767 = vmul.f32 %v1695, 1.442695
        %v1768 = vpow.pop %v1767
        %v1769 = vmul.f32 %v1696, 1.442695
        %v1770 = vpow.pop %v1769
        %v1771 = vmul.f32 %v1697, 1.442695
        %v1772 = vpow.pop %v1771
        %v1773 = vmul.f32 %v1698, 1.442695
        %v1774 = vpow.pop %v1773
        %v1775 = vmul.f32 %v1699, 1.442695
        %v1776 = vpow.pop %v1775
        %v1777 = vmul.f32 %v1700, 1.442695
        %v1778 = vpow.pop %v1777
        %v1779 = vmul.f32 %v1701, 1.442695
        %v1780 = vpow.pop %v1779
        %v1781 = vmul.f32 %v1702, 1.442695
        %v1782 = vpow.pop %v1781
        %v1783 = vmul.f32 %v1703, 1.442695
        %v1784 = vpow.pop %v1783
        %v1785 = vmul.f32 %v1704, 1.442695
        %v1786 = vpow.pop %v1785
        %v1787 = vmul.f32 %v1705, 1.442695
        %v1788 = vpow.pop %v1787
        %v1789 = vmul.f32 %v1706, 1.442695
        %v1790 = vpow.pop %v1789
        %v1791 = vmul.f32 %v1707, 1.442695
        %v1792 = vpow.pop %v1791
        %v1793 = vmul.f32 %v1708, 1.442695
        %v1794 = vpow.pop %v1793
        %v1795 = vmul.f32 %v1709, 1.442695
        %v1796 = vpow.pop %v1795
        %v1797 = vmul.f32 %v1710, 1.442695
        %v1798 = vpow.pop %v1797
        %v1799 = vmul.f32 %v1711, 1.442695
        %v1800 = vpow.pop %v1799
        %v1801 = vmul.f32 %v1712, 1.442695
        %v1802 = vpow.pop %v1801
        %v1803 = vmul.f32 %v1713, 1.442695
        %v1804 = vpow.pop %v1803
        %v1805 = vmul.f32 %v1714, 1.442695
        %v1806 = vpow.pop %v1805
        %v1807 = vmul.f32 %v1715, 1.442695
        %v1808 = vpow.pop %v1807
        %v1809 = vmul.f32 %v1716, 1.442695
        %v1810 = vpow.pop %v1809
        %v1811 = vmul.f32 %v1717, 1.442695
        %v1812 = vpow.pop %v1811
        %v1813 = vmul.f32 %v1718, 1.442695
        %v1814 = vpow.pop %v1813
        %v1815 = vmul.f32 %v1719, 1.442695
        %v1816 = vpow.pop %v1815
        %v1817 = vmul.f32 %v1720, 1.442695
        %v1818 = vpow.pop %v1817
        %v1819 = vmul.f32 %v1721, 1.442695
        %v1820 = vpow.pop %v1819
        %v1821 = vmul.f32 %v1722, 1.442695
        %v1822 = vpow.pop %v1821
        %v1823 = vmul.f32 %v1723, 1.442695
        %v1824 = vpow.pop %v1823
        %v1825 = vmul.f32 %v1724, 1.442695
        %v1826 = vpow.pop %v1825
        %v1827 = vmul.f32 %v1725, 1.442695
        %v1828 = vpow.pop %v1827
        %v1829 = vmul.f32 %v1726, 1.442695
        %v1830 = vpow.pop %v1829
        %v1831 = vmul.f32 %v1727, 1.442695
        %v1832 = vpow.pop %v1831
        %v1833 = vmul.f32 %v1728, 1.442695
        %v1834 = vpow.pop %v1833
        %v1835 = vmul.f32 %v1729, 1.442695
        %v1836 = vpow.pop %v1835
        %v1837 = vmul.f32 %v1730, 1.442695
        %v1838 = vpow.pop %v1837
        %v1839 = vmul.f32 %v1731, 1.442695
        %v1840 = vpow.pop %v1839
        %v1841 = vmul.f32 %v1732, 1.442695
        %v1842 = vpow.pop %v1841
        %v1843 = vmul.f32 %v1733, 1.442695
        %v1844 = vpow.pop %v1843
        %v1845 = vmul.f32 %v1734, 1.442695
        %v1846 = vpow.pop %v1845
        %v1847 = vmul.f32 %v1735, 1.442695
        %v1848 = vpow.pop %v1847
        %v1849 = vmul.f32 %v1736, 1.442695
        %v1850 = vpow.pop %v1849
        %v1851 = vmul.f32 %v1737, 1.442695
        %v1852 = vpow.pop %v1851
        %v1853 = vmul.f32 %v1738, 1.442695
        %v1854 = vpow.pop %v1853
        %v1855 = vmul.f32 %v1739, 1.442695
        %v1856 = vpow.pop %v1855
        %v1857 = vmul.f32 %v1740, 1.442695
        %v1858 = vpow.pop %v1857
        %v1859 = vmul.f32 %v1741, 1.442695
        %v1860 = vpow.pop %v1859
        %v1861 = vmul.f32 %v1742, 1.442695
        %v1862 = vpow.pop %v1861
        %v1863 = vmul.f32 %v1743, 1.442695
        %v1864 = vpow.pop %v1863
        %v1865 = vmul.f32 %v1744, 1.442695
        %v1866 = vpow.pop %v1865
        %v1867 = vmul.f32 %v1745, 1.442695
        %v1868 = vpow.pop %v1867
        %v1869 = vmul.f32 %v1746, 1.442695
        %v1870 = vpow.pop %v1869
        %v1871 = vmul.f32 %v1747, 1.442695
        %v1872 = vpow.pop %v1871
        %v1873 = vmul.f32 %v1748, 1.442695
        %v1874 = vpow.pop %v1873
        %v1875 = vmul.f32 %v1749, 1.442695
        %v1876 = vpow.pop %v1875
        %v1877 = vmul.f32 %v1750, 1.442695
        %v1878 = vpow.pop %v1877
        %1943 = vrot.lane.b32.xlu0 %v1623, 3
        %v1944 = vpop.permute.xlu0 %1943
        %1945 = vrot.lane.b32.xlu0 %v1624, 3
        %v1946 = vpop.permute.xlu0 %1945
        %1947 = vrot.lane.b32.xlu0 %v1625, 3
        %v1948 = vpop.permute.xlu0 %1947
        %1949 = vrot.lane.b32.xlu0 %v1626, 3
        %v1950 = vpop.permute.xlu0 %1949
        %1951 = vrot.lane.b32.xlu0 %v1627, 3
        %v1952 = vpop.permute.xlu0 %1951
        %1953 = vrot.lane.b32.xlu0 %v1628, 3
        %v1954 = vpop.permute.xlu0 %1953
        %1955 = vrot.lane.b32.xlu0 %v1629, 3
        %v1956 = vpop.permute.xlu0 %1955
        %1957 = vrot.lane.b32.xlu0 %v1630, 3
        %v1958 = vpop.permute.xlu0 %1957
        %1959 = vrot.lane.b32.xlu0 %v1631, 3
        %v1960 = vpop.permute.xlu0 %1959
        %1961 = vrot.lane.b32.xlu0 %v1632, 3
        %v1962 = vpop.permute.xlu0 %1961
        %1963 = vrot.lane.b32.xlu0 %v1633, 3
        %v1964 = vpop.permute.xlu0 %1963
        %1965 = vrot.lane.b32.xlu0 %v1634, 3
        %v1966 = vpop.permute.xlu0 %1965
        %1967 = vrot.lane.b32.xlu0 %v1635, 3
        %v1968 = vpop.permute.xlu0 %1967
        %1969 = vrot.lane.b32.xlu0 %v1636, 3
        %v1970 = vpop.permute.xlu0 %1969
        %1971 = vrot.lane.b32.xlu0 %v1637, 3
        %v1972 = vpop.permute.xlu0 %1971
        %1973 = vrot.lane.b32.xlu0 %v1638, 3
        %v1974 = vpop.permute.xlu0 %1973
        %1975 = vrot.lane.b32.xlu0 %v1639, 3
        %v1976 = vpop.permute.xlu0 %1975
        %1977 = vrot.lane.b32.xlu0 %v1640, 3
        %v1978 = vpop.permute.xlu0 %1977
        %1979 = vrot.lane.b32.xlu0 %v1641, 3
        %v1980 = vpop.permute.xlu0 %1979
        %1981 = vrot.lane.b32.xlu0 %v1642, 3
        %v1982 = vpop.permute.xlu0 %1981
        %1983 = vrot.lane.b32.xlu0 %v1643, 3
        %v1984 = vpop.permute.xlu0 %1983
        %1985 = vrot.lane.b32.xlu0 %v1644, 3
        %v1986 = vpop.permute.xlu0 %1985
        %1987 = vrot.lane.b32.xlu0 %v1645, 3
        %v1988 = vpop.permute.xlu0 %1987
        %1989 = vrot.lane.b32.xlu0 %v1646, 3
        %v1990 = vpop.permute.xlu0 %1989
        %1991 = vrot.lane.b32.xlu0 %v1647, 3
        %v1992 = vpop.permute.xlu0 %1991
        %1993 = vrot.lane.b32.xlu0 %v1648, 3
        %v1994 = vpop.permute.xlu0 %1993
        %1995 = vrot.lane.b32.xlu0 %v1649, 3
        %v1996 = vpop.permute.xlu0 %1995
        %1997 = vrot.lane.b32.xlu0 %v1650, 3
        %v1998 = vpop.permute.xlu0 %1997
        %1999 = vrot.lane.b32.xlu0 %v1651, 3
        %v2000 = vpop.permute.xlu0 %1999
        %2001 = vrot.lane.b32.xlu0 %v1652, 3
        %v2002 = vpop.permute.xlu0 %2001
        %2003 = vrot.lane.b32.xlu0 %v1653, 3
        %v2004 = vpop.permute.xlu0 %2003
        %2005 = vrot.lane.b32.xlu0 %v1654, 3
        %v2006 = vpop.permute.xlu0 %2005
        %2007 = vrot.lane.b32.xlu0 %v1655, 3
        %v2008 = vpop.permute.xlu0 %2007
        %2009 = vrot.lane.b32.xlu0 %v1656, 3
        %v2010 = vpop.permute.xlu0 %2009
        %2011 = vrot.lane.b32.xlu0 %v1657, 3
        %v2012 = vpop.permute.xlu0 %2011
        %2013 = vrot.lane.b32.xlu0 %v1658, 3
        %v2014 = vpop.permute.xlu0 %2013
        %2015 = vrot.lane.b32.xlu0 %v1659, 3
        %v2016 = vpop.permute.xlu0 %2015
        %2017 = vrot.lane.b32.xlu0 %v1660, 3
        %v2018 = vpop.permute.xlu0 %2017
        %2019 = vrot.lane.b32.xlu0 %v1661, 3
        %v2020 = vpop.permute.xlu0 %2019
        %2021 = vrot.lane.b32.xlu0 %v1662, 3
        %v2022 = vpop.permute.xlu0 %2021
        %2023 = vrot.lane.b32.xlu0 %v1663, 3
        %v2024 = vpop.permute.xlu0 %2023
        %2025 = vrot.lane.b32.xlu0 %v1664, 3
        %v2026 = vpop.permute.xlu0 %2025
        %2027 = vrot.lane.b32.xlu0 %v1665, 3
        %v2028 = vpop.permute.xlu0 %2027
        %2029 = vrot.lane.b32.xlu0 %v1666, 3
        %v2030 = vpop.permute.xlu0 %2029
        %2031 = vrot.lane.b32.xlu0 %v1667, 3
        %v2032 = vpop.permute.xlu0 %2031
        %2033 = vrot.lane.b32.xlu0 %v1668, 3
        %v2034 = vpop.permute.xlu0 %2033
        %2035 = vrot.lane.b32.xlu0 %v1669, 3
        %v2036 = vpop.permute.xlu0 %2035
        %2037 = vrot.lane.b32.xlu0 %v1670, 3
        %v2038 = vpop.permute.xlu0 %2037
        %2039 = vrot.lane.b32.xlu0 %v1671, 3
        %v2040 = vpop.permute.xlu0 %2039
        %2041 = vrot.lane.b32.xlu0 %v1672, 3
        %v2042 = vpop.permute.xlu0 %2041
        %2043 = vrot.lane.b32.xlu0 %v1673, 3
        %v2044 = vpop.permute.xlu0 %2043
        %2045 = vrot.lane.b32.xlu0 %v1674, 3
        %v2046 = vpop.permute.xlu0 %2045
        %2047 = vrot.lane.b32.xlu0 %v1675, 3
        %v2048 = vpop.permute.xlu0 %2047
        %2049 = vrot.lane.b32.xlu0 %v1676, 3
        %v2050 = vpop.permute.xlu0 %2049
        %2051 = vrot.lane.b32.xlu0 %v1677, 3
        %v2052 = vpop.permute.xlu0 %2051
        %2053 = vrot.lane.b32.xlu0 %v1678, 3
        %v2054 = vpop.permute.xlu0 %2053
        %2055 = vrot.lane.b32.xlu0 %v1679, 3
        %v2056 = vpop.permute.xlu0 %2055
        %2057 = vrot.lane.b32.xlu0 %v1680, 3
        %v2058 = vpop.permute.xlu0 %2057
        %2059 = vrot.lane.b32.xlu0 %v1681, 3
        %v2060 = vpop.permute.xlu0 %2059
        %2061 = vrot.lane.b32.xlu0 %v1682, 3
        %v2062 = vpop.permute.xlu0 %2061
        %2063 = vrot.lane.b32.xlu0 %v1683, 3
        %v2064 = vpop.permute.xlu0 %2063
        %2065 = vrot.lane.b32.xlu0 %v1684, 3
        %v2066 = vpop.permute.xlu0 %2065
        %2067 = vrot.lane.b32.xlu0 %v1685, 3
        %v2068 = vpop.permute.xlu0 %2067
        %2069 = vrot.lane.b32.xlu0 %v1686, 3
        %v2070 = vpop.permute.xlu0 %2069
        %v2135 = vsub.f32 %v1113, %v1944
        %v2136 = vsub.f32 %v1116, %v1946
        %v2137 = vsub.f32 %v1121, %v1948
        %v2138 = vsub.f32 %v1124, %v1950
        %v2139 = vsub.f32 %v1129, %v1952
        %v2140 = vsub.f32 %v1132, %v1954
        %v2141 = vsub.f32 %v1137, %v1956
        %v2142 = vsub.f32 %v1140, %v1958
        %v2143 = vsub.f32 %v1145, %v1960
        %v2144 = vsub.f32 %v1148, %v1962
        %v2145 = vsub.f32 %v1153, %v1964
        %v2146 = vsub.f32 %v1156, %v1966
        %v2147 = vsub.f32 %v1161, %v1968
        %v2148 = vsub.f32 %v1164, %v1970
        %v2149 = vsub.f32 %v1169, %v1972
        %v2150 = vsub.f32 %v1172, %v1974
        %v2151 = vsub.f32 %v1177, %v1976
        %v2152 = vsub.f32 %v1180, %v1978
        %v2153 = vsub.f32 %v1185, %v1980
        %v2154 = vsub.f32 %v1188, %v1982
        %v2155 = vsub.f32 %v1193, %v1984
        %v2156 = vsub.f32 %v1196, %v1986
        %v2157 = vsub.f32 %v1201, %v1988
        %v2158 = vsub.f32 %v1204, %v1990
        %v2159 = vsub.f32 %v1209, %v1992
        %v2160 = vsub.f32 %v1212, %v1994
        %v2161 = vsub.f32 %v1217, %v1996
        %v2162 = vsub.f32 %v1220, %v1998
        %v2163 = vsub.f32 %v1225, %v2000
        %v2164 = vsub.f32 %v1228, %v2002
        %v2165 = vsub.f32 %v1233, %v2004
        %v2166 = vsub.f32 %v1236, %v2006
        %v2167 = vsub.f32 %v1241, %v2008
        %v2168 = vsub.f32 %v1244, %v2010
        %v2169 = vsub.f32 %v1249, %v2012
        %v2170 = vsub.f32 %v1252, %v2014
        %v2171 = vsub.f32 %v1257, %v2016
        %v2172 = vsub.f32 %v1260, %v2018
        %v2173 = vsub.f32 %v1265, %v2020
        %v2174 = vsub.f32 %v1268, %v2022
        %v2175 = vsub.f32 %v1273, %v2024
        %v2176 = vsub.f32 %v1276, %v2026
        %v2177 = vsub.f32 %v1281, %v2028
        %v2178 = vsub.f32 %v1284, %v2030
        %v2179 = vsub.f32 %v1289, %v2032
        %v2180 = vsub.f32 %v1292, %v2034
        %v2181 = vsub.f32 %v1297, %v2036
        %v2182 = vsub.f32 %v1300, %v2038
        %v2183 = vsub.f32 %v1305, %v2040
        %v2184 = vsub.f32 %v1308, %v2042
        %v2185 = vsub.f32 %v1313, %v2044
        %v2186 = vsub.f32 %v1316, %v2046
        %v2187 = vsub.f32 %v1321, %v2048
        %v2188 = vsub.f32 %v1324, %v2050
        %v2189 = vsub.f32 %v1329, %v2052
        %v2190 = vsub.f32 %v1332, %v2054
        %v2191 = vsub.f32 %v1337, %v2056
        %v2192 = vsub.f32 %v1340, %v2058
        %v2193 = vsub.f32 %v1345, %v2060
        %v2194 = vsub.f32 %v1348, %v2062
        %v2195 = vsub.f32 %v1353, %v2064
        %v2196 = vsub.f32 %v1356, %v2066
        %v2197 = vsub.f32 %v1361, %v2068
        %v2198 = vsub.f32 %v1364, %v2070
        %v2199 = vmul.f32 %v2135, 1.442695
        %v2200 = vpow.pop %v2199
        %v2201 = vmul.f32 %v2136, 1.442695
        %v2202 = vpow.pop %v2201
        %v2203 = vmul.f32 %v2137, 1.442695
        %v2204 = vpow.pop %v2203
        %v2205 = vmul.f32 %v2138, 1.442695
        %v2206 = vpow.pop %v2205
        %v2207 = vmul.f32 %v2139, 1.442695
        %v2208 = vpow.pop %v2207
        %v2209 = vmul.f32 %v2140, 1.442695
        %v2210 = vpow.pop %v2209
        %v2211 = vmul.f32 %v2141, 1.442695
        %v2212 = vpow.pop %v2211
        %v2213 = vmul.f32 %v2142, 1.442695
        %v2214 = vpow.pop %v2213
        %v2215 = vmul.f32 %v2143, 1.442695
        %v2216 = vpow.pop %v2215
        %v2217 = vmul.f32 %v2144, 1.442695
        %v2218 = vpow.pop %v2217
        %v2219 = vmul.f32 %v2145, 1.442695
        %v2220 = vpow.pop %v2219
        %v2221 = vmul.f32 %v2146, 1.442695
        %v2222 = vpow.pop %v2221
        %v2223 = vmul.f32 %v2147, 1.442695
        %v2224 = vpow.pop %v2223
        %v2225 = vmul.f32 %v2148, 1.442695
        %v2226 = vpow.pop %v2225
        %v2227 = vmul.f32 %v2149, 1.442695
        %v2228 = vpow.pop %v2227
        %v2229 = vmul.f32 %v2150, 1.442695
        %v2230 = vpow.pop %v2229
        %v2231 = vmul.f32 %v2151, 1.442695
        %v2232 = vpow.pop %v2231
        %v2233 = vmul.f32 %v2152, 1.442695
        %v2234 = vpow.pop %v2233
        %v2235 = vmul.f32 %v2153, 1.442695
        %v2236 = vpow.pop %v2235
        %v2237 = vmul.f32 %v2154, 1.442695
        %v2238 = vpow.pop %v2237
        %v2239 = vmul.f32 %v2155, 1.442695
        %v2240 = vpow.pop %v2239
        %v2241 = vmul.f32 %v2156, 1.442695
        %v2242 = vpow.pop %v2241
        %v2243 = vmul.f32 %v2157, 1.442695
        %v2244 = vpow.pop %v2243
        %v2245 = vmul.f32 %v2158, 1.442695
        %v2246 = vpow.pop %v2245
        %v2247 = vmul.f32 %v2159, 1.442695
        %v2248 = vpow.pop %v2247
        %v2249 = vmul.f32 %v2160, 1.442695
        %v2250 = vpow.pop %v2249
        %v2251 = vmul.f32 %v2161, 1.442695
        %v2252 = vpow.pop %v2251
        %v2253 = vmul.f32 %v2162, 1.442695
        %v2254 = vpow.pop %v2253
        %v2255 = vmul.f32 %v2163, 1.442695
        %v2256 = vpow.pop %v2255
        %v2257 = vmul.f32 %v2164, 1.442695
        %v2258 = vpow.pop %v2257
        %v2259 = vmul.f32 %v2165, 1.442695
        %v2260 = vpow.pop %v2259
        %v2261 = vmul.f32 %v2166, 1.442695
        %v2262 = vpow.pop %v2261
        %v2263 = vmul.f32 %v2167, 1.442695
        %v2264 = vpow.pop %v2263
        %v2265 = vmul.f32 %v2168, 1.442695
        %v2266 = vpow.pop %v2265
        %v2267 = vmul.f32 %v2169, 1.442695
        %v2268 = vpow.pop %v2267
        %v2269 = vmul.f32 %v2170, 1.442695
        %v2270 = vpow.pop %v2269
        %v2271 = vmul.f32 %v2171, 1.442695
        %v2272 = vpow.pop %v2271
        %v2273 = vmul.f32 %v2172, 1.442695
        %v2274 = vpow.pop %v2273
        %v2275 = vmul.f32 %v2173, 1.442695
        %v2276 = vpow.pop %v2275
        %v2277 = vmul.f32 %v2174, 1.442695
        %v2278 = vpow.pop %v2277
        %v2279 = vmul.f32 %v2175, 1.442695
        %v2280 = vpow.pop %v2279
        %v2281 = vmul.f32 %v2176, 1.442695
        %v2282 = vpow.pop %v2281
        %v2283 = vmul.f32 %v2177, 1.442695
        %v2284 = vpow.pop %v2283
        %v2285 = vmul.f32 %v2178, 1.442695
        %v2286 = vpow.pop %v2285
        %v2287 = vmul.f32 %v2179, 1.442695
        %v2288 = vpow.pop %v2287
        %v2289 = vmul.f32 %v2180, 1.442695
        %v2290 = vpow.pop %v2289
        %v2291 = vmul.f32 %v2181, 1.442695
        %v2292 = vpow.pop %v2291
        %v2293 = vmul.f32 %v2182, 1.442695
        %v2294 = vpow.pop %v2293
        %v2295 = vmul.f32 %v2183, 1.442695
        %v2296 = vpow.pop %v2295
        %v2297 = vmul.f32 %v2184, 1.442695
        %v2298 = vpow.pop %v2297
        %v2299 = vmul.f32 %v2185, 1.442695
        %v2300 = vpow.pop %v2299
        %v2301 = vmul.f32 %v2186, 1.442695
        %v2302 = vpow.pop %v2301
        %v2303 = vmul.f32 %v2187, 1.442695
        %v2304 = vpow.pop %v2303
        %v2305 = vmul.f32 %v2188, 1.442695
        %v2306 = vpow.pop %v2305
        %v2307 = vmul.f32 %v2189, 1.442695
        %v2308 = vpow.pop %v2307
        %v2309 = vmul.f32 %v2190, 1.442695
        %v2310 = vpow.pop %v2309
        %v2311 = vmul.f32 %v2191, 1.442695
        %v2312 = vpow.pop %v2311
        %v2313 = vmul.f32 %v2192, 1.442695
        %v2314 = vpow.pop %v2313
        %v2315 = vmul.f32 %v2193, 1.442695
        %v2316 = vpow.pop %v2315
        %v2317 = vmul.f32 %v2194, 1.442695
        %v2318 = vpow.pop %v2317
        %v2319 = vmul.f32 %v2195, 1.442695
        %v2320 = vpow.pop %v2319
        %v2321 = vmul.f32 %v2196, 1.442695
        %v2322 = vpow.pop %v2321
        %v2323 = vmul.f32 %v2197, 1.442695
        %v2324 = vpow.pop %v2323
        %v2325 = vmul.f32 %v2198, 1.442695
        %v2326 = vpow.pop %v2325
        %2391 = vrot.lane.b32.xlu0 %v2200, 125
        %v2392 = vpop.permute.xlu0 %2391
        %2393 = vrot.lane.b32.xlu0 %v2202, 125
        %v2394 = vpop.permute.xlu0 %2393
        %2395 = vrot.lane.b32.xlu0 %v2204, 125
        %v2396 = vpop.permute.xlu0 %2395
        %2397 = vrot.lane.b32.xlu0 %v2206, 125
        %v2398 = vpop.permute.xlu0 %2397
        %2399 = vrot.lane.b32.xlu0 %v2208, 125
        %v2400 = vpop.permute.xlu0 %2399
        %2401 = vrot.lane.b32.xlu0 %v2210, 125
        %v2402 = vpop.permute.xlu0 %2401
        %2403 = vrot.lane.b32.xlu0 %v2212, 125
        %v2404 = vpop.permute.xlu0 %2403
        %2405 = vrot.lane.b32.xlu0 %v2214, 125
        %v2406 = vpop.permute.xlu0 %2405
        %2407 = vrot.lane.b32.xlu0 %v2216, 125
        %v2408 = vpop.permute.xlu0 %2407
        %2409 = vrot.lane.b32.xlu0 %v2218, 125
        %v2410 = vpop.permute.xlu0 %2409
        %2411 = vrot.lane.b32.xlu0 %v2220, 125
        %v2412 = vpop.permute.xlu0 %2411
        %2413 = vrot.lane.b32.xlu0 %v2222, 125
        %v2414 = vpop.permute.xlu0 %2413
        %2415 = vrot.lane.b32.xlu0 %v2224, 125
        %v2416 = vpop.permute.xlu0 %2415
        %2417 = vrot.lane.b32.xlu0 %v2226, 125
        %v2418 = vpop.permute.xlu0 %2417
        %2419 = vrot.lane.b32.xlu0 %v2228, 125
        %v2420 = vpop.permute.xlu0 %2419
        %2421 = vrot.lane.b32.xlu0 %v2230, 125
        %v2422 = vpop.permute.xlu0 %2421
        %2423 = vrot.lane.b32.xlu0 %v2232, 125
        %v2424 = vpop.permute.xlu0 %2423
        %2425 = vrot.lane.b32.xlu0 %v2234, 125
        %v2426 = vpop.permute.xlu0 %2425
        %2427 = vrot.lane.b32.xlu0 %v2236, 125
        %v2428 = vpop.permute.xlu0 %2427
        %2429 = vrot.lane.b32.xlu0 %v2238, 125
        %v2430 = vpop.permute.xlu0 %2429
        %2431 = vrot.lane.b32.xlu0 %v2240, 125
        %v2432 = vpop.permute.xlu0 %2431
        %2433 = vrot.lane.b32.xlu0 %v2242, 125
        %v2434 = vpop.permute.xlu0 %2433
        %2435 = vrot.lane.b32.xlu0 %v2244, 125
        %v2436 = vpop.permute.xlu0 %2435
        %2437 = vrot.lane.b32.xlu0 %v2246, 125
        %v2438 = vpop.permute.xlu0 %2437
        %2439 = vrot.lane.b32.xlu0 %v2248, 125
        %v2440 = vpop.permute.xlu0 %2439
        %2441 = vrot.lane.b32.xlu0 %v2250, 125
        %v2442 = vpop.permute.xlu0 %2441
        %2443 = vrot.lane.b32.xlu0 %v2252, 125
        %v2444 = vpop.permute.xlu0 %2443
        %2445 = vrot.lane.b32.xlu0 %v2254, 125
        %v2446 = vpop.permute.xlu0 %2445
        %2447 = vrot.lane.b32.xlu0 %v2256, 125
        %v2448 = vpop.permute.xlu0 %2447
        %2449 = vrot.lane.b32.xlu0 %v2258, 125
        %v2450 = vpop.permute.xlu0 %2449
        %2451 = vrot.lane.b32.xlu0 %v2260, 125
        %v2452 = vpop.permute.xlu0 %2451
        %2453 = vrot.lane.b32.xlu0 %v2262, 125
        %v2454 = vpop.permute.xlu0 %2453
        %2455 = vrot.lane.b32.xlu0 %v2264, 125
        %v2456 = vpop.permute.xlu0 %2455
        %2457 = vrot.lane.b32.xlu0 %v2266, 125
        %v2458 = vpop.permute.xlu0 %2457
        %2459 = vrot.lane.b32.xlu0 %v2268, 125
        %v2460 = vpop.permute.xlu0 %2459
        %2461 = vrot.lane.b32.xlu0 %v2270, 125
        %v2462 = vpop.permute.xlu0 %2461
        %2463 = vrot.lane.b32.xlu0 %v2272, 125
        %v2464 = vpop.permute.xlu0 %2463
        %2465 = vrot.lane.b32.xlu0 %v2274, 125
        %v2466 = vpop.permute.xlu0 %2465
        %2467 = vrot.lane.b32.xlu0 %v2276, 125
        %v2468 = vpop.permute.xlu0 %2467
        %2469 = vrot.lane.b32.xlu0 %v2278, 125
        %v2470 = vpop.permute.xlu0 %2469
        %2471 = vrot.lane.b32.xlu0 %v2280, 125
        %v2472 = vpop.permute.xlu0 %2471
        %2473 = vrot.lane.b32.xlu0 %v2282, 125
        %v2474 = vpop.permute.xlu0 %2473
        %2475 = vrot.lane.b32.xlu0 %v2284, 125
        %v2476 = vpop.permute.xlu0 %2475
        %2477 = vrot.lane.b32.xlu0 %v2286, 125
        %v2478 = vpop.permute.xlu0 %2477
        %2479 = vrot.lane.b32.xlu0 %v2288, 125
        %v2480 = vpop.permute.xlu0 %2479
        %2481 = vrot.lane.b32.xlu0 %v2290, 125
        %v2482 = vpop.permute.xlu0 %2481
        %2483 = vrot.lane.b32.xlu0 %v2292, 125
        %v2484 = vpop.permute.xlu0 %2483
        %2485 = vrot.lane.b32.xlu0 %v2294, 125
        %v2486 = vpop.permute.xlu0 %2485
        %2487 = vrot.lane.b32.xlu0 %v2296, 125
        %v2488 = vpop.permute.xlu0 %2487
        %2489 = vrot.lane.b32.xlu0 %v2298, 125
        %v2490 = vpop.permute.xlu0 %2489
        %2491 = vrot.lane.b32.xlu0 %v2300, 125
        %v2492 = vpop.permute.xlu0 %2491
        %2493 = vrot.lane.b32.xlu0 %v2302, 125
        %v2494 = vpop.permute.xlu0 %2493
        %2495 = vrot.lane.b32.xlu0 %v2304, 125
        %v2496 = vpop.permute.xlu0 %2495
        %2497 = vrot.lane.b32.xlu0 %v2306, 125
        %v2498 = vpop.permute.xlu0 %2497
        %2499 = vrot.lane.b32.xlu0 %v2308, 125
        %v2500 = vpop.permute.xlu0 %2499
        %2501 = vrot.lane.b32.xlu0 %v2310, 125
        %v2502 = vpop.permute.xlu0 %2501
        %2503 = vrot.lane.b32.xlu0 %v2312, 125
        %v2504 = vpop.permute.xlu0 %2503
        %2505 = vrot.lane.b32.xlu0 %v2314, 125
        %v2506 = vpop.permute.xlu0 %2505
        %2507 = vrot.lane.b32.xlu0 %v2316, 125
        %v2508 = vpop.permute.xlu0 %2507
        %2509 = vrot.lane.b32.xlu0 %v2318, 125
        %v2510 = vpop.permute.xlu0 %2509
        %2511 = vrot.lane.b32.xlu0 %v2320, 125
        %v2512 = vpop.permute.xlu0 %2511
        %2513 = vrot.lane.b32.xlu0 %v2322, 125
        %v2514 = vpop.permute.xlu0 %2513
        %2515 = vrot.lane.b32.xlu0 %v2324, 125
        %v2516 = vpop.permute.xlu0 %2515
        %2517 = vrot.lane.b32.xlu0 %v2326, 125
        %v2518 = vpop.permute.xlu0 %2517
        %v2583 = vadd.f32 %v1752, %v2392
        %v2584 = vadd.f32 %v1754, %v2394
        %v2585 = vadd.f32 %v1756, %v2396
        %v2586 = vadd.f32 %v1758, %v2398
        %v2587 = vadd.f32 %v1760, %v2400
        %v2588 = vadd.f32 %v1762, %v2402
        %v2589 = vadd.f32 %v1764, %v2404
        %v2590 = vadd.f32 %v1766, %v2406
        %v2591 = vadd.f32 %v1768, %v2408
        %v2592 = vadd.f32 %v1770, %v2410
        %v2593 = vadd.f32 %v1772, %v2412
        %v2594 = vadd.f32 %v1774, %v2414
        %v2595 = vadd.f32 %v1776, %v2416
        %v2596 = vadd.f32 %v1778, %v2418
        %v2597 = vadd.f32 %v1780, %v2420
        %v2598 = vadd.f32 %v1782, %v2422
        %v2599 = vadd.f32 %v1784, %v2424
        %v2600 = vadd.f32 %v1786, %v2426
        %v2601 = vadd.f32 %v1788, %v2428
        %v2602 = vadd.f32 %v1790, %v2430
        %v2603 = vadd.f32 %v1792, %v2432
        %v2604 = vadd.f32 %v1794, %v2434
        %v2605 = vadd.f32 %v1796, %v2436
        %v2606 = vadd.f32 %v1798, %v2438
        %v2607 = vadd.f32 %v1800, %v2440
        %v2608 = vadd.f32 %v1802, %v2442
        %v2609 = vadd.f32 %v1804, %v2444
        %v2610 = vadd.f32 %v1806, %v2446
        %v2611 = vadd.f32 %v1808, %v2448
        %v2612 = vadd.f32 %v1810, %v2450
        %v2613 = vadd.f32 %v1812, %v2452
        %v2614 = vadd.f32 %v1814, %v2454
        %v2615 = vadd.f32 %v1816, %v2456
        %v2616 = vadd.f32 %v1818, %v2458
        %v2617 = vadd.f32 %v1820, %v2460
        %v2618 = vadd.f32 %v1822, %v2462
        %v2619 = vadd.f32 %v1824, %v2464
        %v2620 = vadd.f32 %v1826, %v2466
        %v2621 = vadd.f32 %v1828, %v2468
        %v2622 = vadd.f32 %v1830, %v2470
        %v2623 = vadd.f32 %v1832, %v2472
        %v2624 = vadd.f32 %v1834, %v2474
        %v2625 = vadd.f32 %v1836, %v2476
        %v2626 = vadd.f32 %v1838, %v2478
        %v2627 = vadd.f32 %v1840, %v2480
        %v2628 = vadd.f32 %v1842, %v2482
        %v2629 = vadd.f32 %v1844, %v2484
        %v2630 = vadd.f32 %v1846, %v2486
        %v2631 = vadd.f32 %v1848, %v2488
        %v2632 = vadd.f32 %v1850, %v2490
        %v2633 = vadd.f32 %v1852, %v2492
        %v2634 = vadd.f32 %v1854, %v2494
        %v2635 = vadd.f32 %v1856, %v2496
        %v2636 = vadd.f32 %v1858, %v2498
        %v2637 = vadd.f32 %v1860, %v2500
        %v2638 = vadd.f32 %v1862, %v2502
        %v2639 = vadd.f32 %v1864, %v2504
        %v2640 = vadd.f32 %v1866, %v2506
        %v2641 = vadd.f32 %v1868, %v2508
        %v2642 = vadd.f32 %v1870, %v2510
        %v2643 = vadd.f32 %v1872, %v2512
        %v2644 = vadd.f32 %v1874, %v2514
        %v2645 = vadd.f32 %v1876, %v2516
        %v2646 = vadd.f32 %v1878, %v2518
        %v2647 = vrcp.pop %v2583
        %v2648 = vrcp.pop %v2584
        %v2649 = vrcp.pop %v2585
        %v2650 = vrcp.pop %v2586
        %v2651 = vrcp.pop %v2587
        %v2652 = vrcp.pop %v2588
        %v2653 = vrcp.pop %v2589
        %v2654 = vrcp.pop %v2590
        %v2655 = vrcp.pop %v2591
        %v2656 = vrcp.pop %v2592
        %v2657 = vrcp.pop %v2593
        %v2658 = vrcp.pop %v2594
        %v2659 = vrcp.pop %v2595
        %v2660 = vrcp.pop %v2596
        %v2661 = vrcp.pop %v2597
        %v2662 = vrcp.pop %v2598
        %v2663 = vrcp.pop %v2599
        %v2664 = vrcp.pop %v2600
        %v2665 = vrcp.pop %v2601
        %v2666 = vrcp.pop %v2602
        %v2667 = vrcp.pop %v2603
        %v2668 = vrcp.pop %v2604
        %v2669 = vrcp.pop %v2605
        %v2670 = vrcp.pop %v2606
        %v2671 = vrcp.pop %v2607
        %v2672 = vrcp.pop %v2608
        %v2673 = vrcp.pop %v2609
        %v2674 = vrcp.pop %v2610
        %v2675 = vrcp.pop %v2611
        %v2676 = vrcp.pop %v2612
        %v2677 = vrcp.pop %v2613
        %v2678 = vrcp.pop %v2614
        %v2679 = vrcp.pop %v2615
        %v2680 = vrcp.pop %v2616
        %v2681 = vrcp.pop %v2617
        %v2682 = vrcp.pop %v2618
        %v2683 = vrcp.pop %v2619
        %v2684 = vrcp.pop %v2620
        %v2685 = vrcp.pop %v2621
        %v2686 = vrcp.pop %v2622
        %v2687 = vrcp.pop %v2623
        %v2688 = vrcp.pop %v2624
        %v2689 = vrcp.pop %v2625
        %v2690 = vrcp.pop %v2626
        %v2691 = vrcp.pop %v2627
        %v2692 = vrcp.pop %v2628
        %v2693 = vrcp.pop %v2629
        %v2694 = vrcp.pop %v2630
        %v2695 = vrcp.pop %v2631
        %v2696 = vrcp.pop %v2632
        %v2697 = vrcp.pop %v2633
        %v2698 = vrcp.pop %v2634
        %v2699 = vrcp.pop %v2635
        %v2700 = vrcp.pop %v2636
        %v2701 = vrcp.pop %v2637
        %v2702 = vrcp.pop %v2638
        %v2703 = vrcp.pop %v2639
        %v2704 = vrcp.pop %v2640
        %v2705 = vrcp.pop %v2641
        %v2706 = vrcp.pop %v2642
        %v2707 = vrcp.pop %v2643
        %v2708 = vrcp.pop %v2644
        %v2709 = vrcp.pop %v2645
        %v2710 = vrcp.pop %v2646
        %v2711 = vmul.f32 %v1752, %v2647
        %v2712 = vmul.f32 %v1754, %v2648
        %v2713 = vmul.f32 %v1756, %v2649
        %v2714 = vmul.f32 %v1758, %v2650
        %v2715 = vmul.f32 %v1760, %v2651
        %v2716 = vmul.f32 %v1762, %v2652
        %v2717 = vmul.f32 %v1764, %v2653
        %v2718 = vmul.f32 %v1766, %v2654
        %v2719 = vmul.f32 %v1768, %v2655
        %v2720 = vmul.f32 %v1770, %v2656
        %v2721 = vmul.f32 %v1772, %v2657
        %v2722 = vmul.f32 %v1774, %v2658
        %v2723 = vmul.f32 %v1776, %v2659
        %v2724 = vmul.f32 %v1778, %v2660
        %v2725 = vmul.f32 %v1780, %v2661
        %v2726 = vmul.f32 %v1782, %v2662
        %v2727 = vmul.f32 %v1784, %v2663
        %v2728 = vmul.f32 %v1786, %v2664
        %v2729 = vmul.f32 %v1788, %v2665
        %v2730 = vmul.f32 %v1790, %v2666
        %v2731 = vmul.f32 %v1792, %v2667
        %v2732 = vmul.f32 %v1794, %v2668
        %v2733 = vmul.f32 %v1796, %v2669
        %v2734 = vmul.f32 %v1798, %v2670
        %v2735 = vmul.f32 %v1800, %v2671
        %v2736 = vmul.f32 %v1802, %v2672
        %v2737 = vmul.f32 %v1804, %v2673
        %v2738 = vmul.f32 %v1806, %v2674
        %v2739 = vmul.f32 %v1808, %v2675
        %v2740 = vmul.f32 %v1810, %v2676
        %v2741 = vmul.f32 %v1812, %v2677
        %v2742 = vmul.f32 %v1814, %v2678
        %v2743 = vmul.f32 %v1816, %v2679
        %v2744 = vmul.f32 %v1818, %v2680
        %v2745 = vmul.f32 %v1820, %v2681
        %v2746 = vmul.f32 %v1822, %v2682
        %v2747 = vmul.f32 %v1824, %v2683
        %v2748 = vmul.f32 %v1826, %v2684
        %v2749 = vmul.f32 %v1828, %v2685
        %v2750 = vmul.f32 %v1830, %v2686
        %v2751 = vmul.f32 %v1832, %v2687
        %v2752 = vmul.f32 %v1834, %v2688
        %v2753 = vmul.f32 %v1836, %v2689
        %v2754 = vmul.f32 %v1838, %v2690
        %v2755 = vmul.f32 %v1840, %v2691
        %v2756 = vmul.f32 %v1842, %v2692
        %v2757 = vmul.f32 %v1844, %v2693
        %v2758 = vmul.f32 %v1846, %v2694
        %v2759 = vmul.f32 %v1848, %v2695
        %v2760 = vmul.f32 %v1850, %v2696
        %v2761 = vmul.f32 %v1852, %v2697
        %v2762 = vmul.f32 %v1854, %v2698
        %v2763 = vmul.f32 %v1856, %v2699
        %v2764 = vmul.f32 %v1858, %v2700
        %v2765 = vmul.f32 %v1860, %v2701
        %v2766 = vmul.f32 %v1862, %v2702
        %v2767 = vmul.f32 %v1864, %v2703
        %v2768 = vmul.f32 %v1866, %v2704
        %v2769 = vmul.f32 %v1868, %v2705
        %v2770 = vmul.f32 %v1870, %v2706
        %v2771 = vmul.f32 %v1872, %v2707
        %v2772 = vmul.f32 %v1874, %v2708
        %v2773 = vmul.f32 %v1876, %v2709
        %v2774 = vmul.f32 %v1878, %v2710
        %2839 = vrot.lane.b32.xlu0 %v2647, 3
        %v2840 = vpop.permute.xlu0 %2839
        %2841 = vrot.lane.b32.xlu0 %v2648, 3
        %v2842 = vpop.permute.xlu0 %2841
        %2843 = vrot.lane.b32.xlu0 %v2649, 3
        %v2844 = vpop.permute.xlu0 %2843
        %2845 = vrot.lane.b32.xlu0 %v2650, 3
        %v2846 = vpop.permute.xlu0 %2845
        %2847 = vrot.lane.b32.xlu0 %v2651, 3
        %v2848 = vpop.permute.xlu0 %2847
        %2849 = vrot.lane.b32.xlu0 %v2652, 3
        %v2850 = vpop.permute.xlu0 %2849
        %2851 = vrot.lane.b32.xlu0 %v2653, 3
        %v2852 = vpop.permute.xlu0 %2851
        %2853 = vrot.lane.b32.xlu0 %v2654, 3
        %v2854 = vpop.permute.xlu0 %2853
        %2855 = vrot.lane.b32.xlu0 %v2655, 3
        %v2856 = vpop.permute.xlu0 %2855
        %2857 = vrot.lane.b32.xlu0 %v2656, 3
        %v2858 = vpop.permute.xlu0 %2857
        %2859 = vrot.lane.b32.xlu0 %v2657, 3
        %v2860 = vpop.permute.xlu0 %2859
        %2861 = vrot.lane.b32.xlu0 %v2658, 3
        %v2862 = vpop.permute.xlu0 %2861
        %2863 = vrot.lane.b32.xlu0 %v2659, 3
        %v2864 = vpop.permute.xlu0 %2863
        %2865 = vrot.lane.b32.xlu0 %v2660, 3
        %v2866 = vpop.permute.xlu0 %2865
        %2867 = vrot.lane.b32.xlu0 %v2661, 3
        %v2868 = vpop.permute.xlu0 %2867
        %2869 = vrot.lane.b32.xlu0 %v2662, 3
        %v2870 = vpop.permute.xlu0 %2869
        %2871 = vrot.lane.b32.xlu0 %v2663, 3
        %v2872 = vpop.permute.xlu0 %2871
        %2873 = vrot.lane.b32.xlu0 %v2664, 3
        %v2874 = vpop.permute.xlu0 %2873
        %2875 = vrot.lane.b32.xlu0 %v2665, 3
        %v2876 = vpop.permute.xlu0 %2875
        %2877 = vrot.lane.b32.xlu0 %v2666, 3
        %v2878 = vpop.permute.xlu0 %2877
        %2879 = vrot.lane.b32.xlu0 %v2667, 3
        %v2880 = vpop.permute.xlu0 %2879
        %2881 = vrot.lane.b32.xlu0 %v2668, 3
        %v2882 = vpop.permute.xlu0 %2881
        %2883 = vrot.lane.b32.xlu0 %v2669, 3
        %v2884 = vpop.permute.xlu0 %2883
        %2885 = vrot.lane.b32.xlu0 %v2670, 3
        %v2886 = vpop.permute.xlu0 %2885
        %2887 = vrot.lane.b32.xlu0 %v2671, 3
        %v2888 = vpop.permute.xlu0 %2887
        %2889 = vrot.lane.b32.xlu0 %v2672, 3
        %v2890 = vpop.permute.xlu0 %2889
        %2891 = vrot.lane.b32.xlu0 %v2673, 3
        %v2892 = vpop.permute.xlu0 %2891
        %2893 = vrot.lane.b32.xlu0 %v2674, 3
        %v2894 = vpop.permute.xlu0 %2893
        %2895 = vrot.lane.b32.xlu0 %v2675, 3
        %v2896 = vpop.permute.xlu0 %2895
        %2897 = vrot.lane.b32.xlu0 %v2676, 3
        %v2898 = vpop.permute.xlu0 %2897
        %2899 = vrot.lane.b32.xlu0 %v2677, 3
        %v2900 = vpop.permute.xlu0 %2899
        %2901 = vrot.lane.b32.xlu0 %v2678, 3
        %v2902 = vpop.permute.xlu0 %2901
        %2903 = vrot.lane.b32.xlu0 %v2679, 3
        %v2904 = vpop.permute.xlu0 %2903
        %2905 = vrot.lane.b32.xlu0 %v2680, 3
        %v2906 = vpop.permute.xlu0 %2905
        %2907 = vrot.lane.b32.xlu0 %v2681, 3
        %v2908 = vpop.permute.xlu0 %2907
        %2909 = vrot.lane.b32.xlu0 %v2682, 3
        %v2910 = vpop.permute.xlu0 %2909
        %2911 = vrot.lane.b32.xlu0 %v2683, 3
        %v2912 = vpop.permute.xlu0 %2911
        %2913 = vrot.lane.b32.xlu0 %v2684, 3
        %v2914 = vpop.permute.xlu0 %2913
        %2915 = vrot.lane.b32.xlu0 %v2685, 3
        %v2916 = vpop.permute.xlu0 %2915
        %2917 = vrot.lane.b32.xlu0 %v2686, 3
        %v2918 = vpop.permute.xlu0 %2917
        %2919 = vrot.lane.b32.xlu0 %v2687, 3
        %v2920 = vpop.permute.xlu0 %2919
        %2921 = vrot.lane.b32.xlu0 %v2688, 3
        %v2922 = vpop.permute.xlu0 %2921
        %2923 = vrot.lane.b32.xlu0 %v2689, 3
        %v2924 = vpop.permute.xlu0 %2923
        %2925 = vrot.lane.b32.xlu0 %v2690, 3
        %v2926 = vpop.permute.xlu0 %2925
        %2927 = vrot.lane.b32.xlu0 %v2691, 3
        %v2928 = vpop.permute.xlu0 %2927
        %2929 = vrot.lane.b32.xlu0 %v2692, 3
        %v2930 = vpop.permute.xlu0 %2929
        %2931 = vrot.lane.b32.xlu0 %v2693, 3
        %v2932 = vpop.permute.xlu0 %2931
        %2933 = vrot.lane.b32.xlu0 %v2694, 3
        %v2934 = vpop.permute.xlu0 %2933
        %2935 = vrot.lane.b32.xlu0 %v2695, 3
        %v2936 = vpop.permute.xlu0 %2935
        %2937 = vrot.lane.b32.xlu0 %v2696, 3
        %v2938 = vpop.permute.xlu0 %2937
        %2939 = vrot.lane.b32.xlu0 %v2697, 3
        %v2940 = vpop.permute.xlu0 %2939
        %2941 = vrot.lane.b32.xlu0 %v2698, 3
        %v2942 = vpop.permute.xlu0 %2941
        %2943 = vrot.lane.b32.xlu0 %v2699, 3
        %v2944 = vpop.permute.xlu0 %2943
        %2945 = vrot.lane.b32.xlu0 %v2700, 3
        %v2946 = vpop.permute.xlu0 %2945
        %2947 = vrot.lane.b32.xlu0 %v2701, 3
        %v2948 = vpop.permute.xlu0 %2947
        %2949 = vrot.lane.b32.xlu0 %v2702, 3
        %v2950 = vpop.permute.xlu0 %2949
        %2951 = vrot.lane.b32.xlu0 %v2703, 3
        %v2952 = vpop.permute.xlu0 %2951
        %2953 = vrot.lane.b32.xlu0 %v2704, 3
        %v2954 = vpop.permute.xlu0 %2953
        %2955 = vrot.lane.b32.xlu0 %v2705, 3
        %v2956 = vpop.permute.xlu0 %2955
        %2957 = vrot.lane.b32.xlu0 %v2706, 3
        %v2958 = vpop.permute.xlu0 %2957
        %2959 = vrot.lane.b32.xlu0 %v2707, 3
        %v2960 = vpop.permute.xlu0 %2959
        %2961 = vrot.lane.b32.xlu0 %v2708, 3
        %v2962 = vpop.permute.xlu0 %2961
        %2963 = vrot.lane.b32.xlu0 %v2709, 3
        %v2964 = vpop.permute.xlu0 %2963
        %2965 = vrot.lane.b32.xlu0 %v2710, 3
        %v2966 = vpop.permute.xlu0 %2965
        %v3031 = vmul.f32 %v2200, %v2840
        %v3032 = vmul.f32 %v2202, %v2842
        %v3033 = vmul.f32 %v2204, %v2844
        %v3034 = vmul.f32 %v2206, %v2846
        %v3035 = vmul.f32 %v2208, %v2848
        %v3036 = vmul.f32 %v2210, %v2850
        %v3037 = vmul.f32 %v2212, %v2852
        %v3038 = vmul.f32 %v2214, %v2854
        %v3039 = vmul.f32 %v2216, %v2856
        %v3040 = vmul.f32 %v2218, %v2858
        %v3041 = vmul.f32 %v2220, %v2860
        %v3042 = vmul.f32 %v2222, %v2862
        %v3043 = vmul.f32 %v2224, %v2864
        %v3044 = vmul.f32 %v2226, %v2866
        %v3045 = vmul.f32 %v2228, %v2868
        %v3046 = vmul.f32 %v2230, %v2870
        %v3047 = vmul.f32 %v2232, %v2872
        %v3048 = vmul.f32 %v2234, %v2874
        %v3049 = vmul.f32 %v2236, %v2876
        %v3050 = vmul.f32 %v2238, %v2878
        %v3051 = vmul.f32 %v2240, %v2880
        %v3052 = vmul.f32 %v2242, %v2882
        %v3053 = vmul.f32 %v2244, %v2884
        %v3054 = vmul.f32 %v2246, %v2886
        %v3055 = vmul.f32 %v2248, %v2888
        %v3056 = vmul.f32 %v2250, %v2890
        %v3057 = vmul.f32 %v2252, %v2892
        %v3058 = vmul.f32 %v2254, %v2894
        %v3059 = vmul.f32 %v2256, %v2896
        %v3060 = vmul.f32 %v2258, %v2898
        %v3061 = vmul.f32 %v2260, %v2900
        %v3062 = vmul.f32 %v2262, %v2902
        %v3063 = vmul.f32 %v2264, %v2904
        %v3064 = vmul.f32 %v2266, %v2906
        %v3065 = vmul.f32 %v2268, %v2908
        %v3066 = vmul.f32 %v2270, %v2910
        %v3067 = vmul.f32 %v2272, %v2912
        %v3068 = vmul.f32 %v2274, %v2914
        %v3069 = vmul.f32 %v2276, %v2916
        %v3070 = vmul.f32 %v2278, %v2918
        %v3071 = vmul.f32 %v2280, %v2920
        %v3072 = vmul.f32 %v2282, %v2922
        %v3073 = vmul.f32 %v2284, %v2924
        %v3074 = vmul.f32 %v2286, %v2926
        %v3075 = vmul.f32 %v2288, %v2928
        %v3076 = vmul.f32 %v2290, %v2930
        %v3077 = vmul.f32 %v2292, %v2932
        %v3078 = vmul.f32 %v2294, %v2934
        %v3079 = vmul.f32 %v2296, %v2936
        %v3080 = vmul.f32 %v2298, %v2938
        %v3081 = vmul.f32 %v2300, %v2940
        %v3082 = vmul.f32 %v2302, %v2942
        %v3083 = vmul.f32 %v2304, %v2944
        %v3084 = vmul.f32 %v2306, %v2946
        %v3085 = vmul.f32 %v2308, %v2948
        %v3086 = vmul.f32 %v2310, %v2950
        %v3087 = vmul.f32 %v2312, %v2952
        %v3088 = vmul.f32 %v2314, %v2954
        %v3089 = vmul.f32 %v2316, %v2956
        %v3090 = vmul.f32 %v2318, %v2958
        %v3091 = vmul.f32 %v2320, %v2960
        %v3092 = vmul.f32 %v2322, %v2962
        %v3093 = vmul.f32 %v2324, %v2964
        %v3094 = vmul.f32 %v2326, %v2966
        %3159 = vrot.lane.b32.xlu0 %v2711, 24
        %v3160 = vpop.permute.xlu0 %3159
        %3161 = vrot.lane.b32.xlu0 %v2712, 24
        %v3162 = vpop.permute.xlu0 %3161
        %3163 = vrot.lane.b32.xlu0 %v2713, 24
        %v3164 = vpop.permute.xlu0 %3163
        %3165 = vrot.lane.b32.xlu0 %v2714, 24
        %v3166 = vpop.permute.xlu0 %3165
        %3167 = vrot.lane.b32.xlu0 %v2715, 24
        %v3168 = vpop.permute.xlu0 %3167
        %3169 = vrot.lane.b32.xlu0 %v2716, 24
        %v3170 = vpop.permute.xlu0 %3169
        %3171 = vrot.lane.b32.xlu0 %v2717, 24
        %v3172 = vpop.permute.xlu0 %3171
        %3173 = vrot.lane.b32.xlu0 %v2718, 24
        %v3174 = vpop.permute.xlu0 %3173
        %3175 = vrot.lane.b32.xlu0 %v2719, 24
        %v3176 = vpop.permute.xlu0 %3175
        %3177 = vrot.lane.b32.xlu0 %v2720, 24
        %v3178 = vpop.permute.xlu0 %3177
        %3179 = vrot.lane.b32.xlu0 %v2721, 24
        %v3180 = vpop.permute.xlu0 %3179
        %3181 = vrot.lane.b32.xlu0 %v2722, 24
        %v3182 = vpop.permute.xlu0 %3181
        %3183 = vrot.lane.b32.xlu0 %v2723, 24
        %v3184 = vpop.permute.xlu0 %3183
        %3185 = vrot.lane.b32.xlu0 %v2724, 24
        %v3186 = vpop.permute.xlu0 %3185
        %3187 = vrot.lane.b32.xlu0 %v2725, 24
        %v3188 = vpop.permute.xlu0 %3187
        %3189 = vrot.lane.b32.xlu0 %v2726, 24
        %v3190 = vpop.permute.xlu0 %3189
        %3191 = vrot.lane.b32.xlu0 %v2727, 24
        %v3192 = vpop.permute.xlu0 %3191
        %3193 = vrot.lane.b32.xlu0 %v2728, 24
        %v3194 = vpop.permute.xlu0 %3193
        %3195 = vrot.lane.b32.xlu0 %v2729, 24
        %v3196 = vpop.permute.xlu0 %3195
        %3197 = vrot.lane.b32.xlu0 %v2730, 24
        %v3198 = vpop.permute.xlu0 %3197
        %3199 = vrot.lane.b32.xlu0 %v2731, 24
        %v3200 = vpop.permute.xlu0 %3199
        %3201 = vrot.lane.b32.xlu0 %v2732, 24
        %v3202 = vpop.permute.xlu0 %3201
        %3203 = vrot.lane.b32.xlu0 %v2733, 24
        %v3204 = vpop.permute.xlu0 %3203
        %3205 = vrot.lane.b32.xlu0 %v2734, 24
        %v3206 = vpop.permute.xlu0 %3205
        %3207 = vrot.lane.b32.xlu0 %v2735, 24
        %v3208 = vpop.permute.xlu0 %3207
        %3209 = vrot.lane.b32.xlu0 %v2736, 24
        %v3210 = vpop.permute.xlu0 %3209
        %3211 = vrot.lane.b32.xlu0 %v2737, 24
        %v3212 = vpop.permute.xlu0 %3211
        %3213 = vrot.lane.b32.xlu0 %v2738, 24
        %v3214 = vpop.permute.xlu0 %3213
        %3215 = vrot.lane.b32.xlu0 %v2739, 24
        %v3216 = vpop.permute.xlu0 %3215
        %3217 = vrot.lane.b32.xlu0 %v2740, 24
        %v3218 = vpop.permute.xlu0 %3217
        %3219 = vrot.lane.b32.xlu0 %v2741, 24
        %v3220 = vpop.permute.xlu0 %3219
        %3221 = vrot.lane.b32.xlu0 %v2742, 24
        %v3222 = vpop.permute.xlu0 %3221
        %3223 = vrot.lane.b32.xlu0 %v2743, 24
        %v3224 = vpop.permute.xlu0 %3223
        %3225 = vrot.lane.b32.xlu0 %v2744, 24
        %v3226 = vpop.permute.xlu0 %3225
        %3227 = vrot.lane.b32.xlu0 %v2745, 24
        %v3228 = vpop.permute.xlu0 %3227
        %3229 = vrot.lane.b32.xlu0 %v2746, 24
        %v3230 = vpop.permute.xlu0 %3229
        %3231 = vrot.lane.b32.xlu0 %v2747, 24
        %v3232 = vpop.permute.xlu0 %3231
        %3233 = vrot.lane.b32.xlu0 %v2748, 24
        %v3234 = vpop.permute.xlu0 %3233
        %3235 = vrot.lane.b32.xlu0 %v2749, 24
        %v3236 = vpop.permute.xlu0 %3235
        %3237 = vrot.lane.b32.xlu0 %v2750, 24
        %v3238 = vpop.permute.xlu0 %3237
        %3239 = vrot.lane.b32.xlu0 %v2751, 24
        %v3240 = vpop.permute.xlu0 %3239
        %3241 = vrot.lane.b32.xlu0 %v2752, 24
        %v3242 = vpop.permute.xlu0 %3241
        %3243 = vrot.lane.b32.xlu0 %v2753, 24
        %v3244 = vpop.permute.xlu0 %3243
        %3245 = vrot.lane.b32.xlu0 %v2754, 24
        %v3246 = vpop.permute.xlu0 %3245
        %3247 = vrot.lane.b32.xlu0 %v2755, 24
        %v3248 = vpop.permute.xlu0 %3247
        %3249 = vrot.lane.b32.xlu0 %v2756, 24
        %v3250 = vpop.permute.xlu0 %3249
        %3251 = vrot.lane.b32.xlu0 %v2757, 24
        %v3252 = vpop.permute.xlu0 %3251
        %3253 = vrot.lane.b32.xlu0 %v2758, 24
        %v3254 = vpop.permute.xlu0 %3253
        %3255 = vrot.lane.b32.xlu0 %v2759, 24
        %v3256 = vpop.permute.xlu0 %3255
        %3257 = vrot.lane.b32.xlu0 %v2760, 24
        %v3258 = vpop.permute.xlu0 %3257
        %3259 = vrot.lane.b32.xlu0 %v2761, 24
        %v3260 = vpop.permute.xlu0 %3259
        %3261 = vrot.lane.b32.xlu0 %v2762, 24
        %v3262 = vpop.permute.xlu0 %3261
        %3263 = vrot.lane.b32.xlu0 %v2763, 24
        %v3264 = vpop.permute.xlu0 %3263
        %3265 = vrot.lane.b32.xlu0 %v2764, 24
        %v3266 = vpop.permute.xlu0 %3265
        %3267 = vrot.lane.b32.xlu0 %v2765, 24
        %v3268 = vpop.permute.xlu0 %3267
        %3269 = vrot.lane.b32.xlu0 %v2766, 24
        %v3270 = vpop.permute.xlu0 %3269
        %3271 = vrot.lane.b32.xlu0 %v2767, 24
        %v3272 = vpop.permute.xlu0 %3271
        %3273 = vrot.lane.b32.xlu0 %v2768, 24
        %v3274 = vpop.permute.xlu0 %3273
        %3275 = vrot.lane.b32.xlu0 %v2769, 24
        %v3276 = vpop.permute.xlu0 %3275
        %3277 = vrot.lane.b32.xlu0 %v2770, 24
        %v3278 = vpop.permute.xlu0 %3277
        %3279 = vrot.lane.b32.xlu0 %v2771, 24
        %v3280 = vpop.permute.xlu0 %3279
        %3281 = vrot.lane.b32.xlu0 %v2772, 24
        %v3282 = vpop.permute.xlu0 %3281
        %3283 = vrot.lane.b32.xlu0 %v2773, 24
        %v3284 = vpop.permute.xlu0 %3283
        %3285 = vrot.lane.b32.xlu0 %v2774, 24
        %v3286 = vpop.permute.xlu0 %3285
        %3415 = vrot.lane.b32.xlu0 %v3031, 24
        %v3416 = vpop.permute.xlu0 %3415
        %3417 = vrot.lane.b32.xlu0 %v3032, 24
        %v3418 = vpop.permute.xlu0 %3417
        %3419 = vrot.lane.b32.xlu0 %v3033, 24
        %v3420 = vpop.permute.xlu0 %3419
        %3421 = vrot.lane.b32.xlu0 %v3034, 24
        %v3422 = vpop.permute.xlu0 %3421
        %3423 = vrot.lane.b32.xlu0 %v3035, 24
        %v3424 = vpop.permute.xlu0 %3423
        %3425 = vrot.lane.b32.xlu0 %v3036, 24
        %v3426 = vpop.permute.xlu0 %3425
        %3427 = vrot.lane.b32.xlu0 %v3037, 24
        %v3428 = vpop.permute.xlu0 %3427
        %3429 = vrot.lane.b32.xlu0 %v3038, 24
        %v3430 = vpop.permute.xlu0 %3429
        %3431 = vrot.lane.b32.xlu0 %v3039, 24
        %v3432 = vpop.permute.xlu0 %3431
        %3433 = vrot.lane.b32.xlu0 %v3040, 24
        %v3434 = vpop.permute.xlu0 %3433
        %3435 = vrot.lane.b32.xlu0 %v3041, 24
        %v3436 = vpop.permute.xlu0 %3435
        %3437 = vrot.lane.b32.xlu0 %v3042, 24
        %v3438 = vpop.permute.xlu0 %3437
        %3439 = vrot.lane.b32.xlu0 %v3043, 24
        %v3440 = vpop.permute.xlu0 %3439
        %3441 = vrot.lane.b32.xlu0 %v3044, 24
        %v3442 = vpop.permute.xlu0 %3441
        %3443 = vrot.lane.b32.xlu0 %v3045, 24
        %v3444 = vpop.permute.xlu0 %3443
        %3445 = vrot.lane.b32.xlu0 %v3046, 24
        %v3446 = vpop.permute.xlu0 %3445
        %3447 = vrot.lane.b32.xlu0 %v3047, 24
        %v3448 = vpop.permute.xlu0 %3447
        %3449 = vrot.lane.b32.xlu0 %v3048, 24
        %v3450 = vpop.permute.xlu0 %3449
        %3451 = vrot.lane.b32.xlu0 %v3049, 24
        %v3452 = vpop.permute.xlu0 %3451
        %3453 = vrot.lane.b32.xlu0 %v3050, 24
        %v3454 = vpop.permute.xlu0 %3453
        %3455 = vrot.lane.b32.xlu0 %v3051, 24
        %v3456 = vpop.permute.xlu0 %3455
        %3457 = vrot.lane.b32.xlu0 %v3052, 24
        %v3458 = vpop.permute.xlu0 %3457
        %3459 = vrot.lane.b32.xlu0 %v3053, 24
        %v3460 = vpop.permute.xlu0 %3459
        %3461 = vrot.lane.b32.xlu0 %v3054, 24
        %v3462 = vpop.permute.xlu0 %3461
        %3463 = vrot.lane.b32.xlu0 %v3055, 24
        %v3464 = vpop.permute.xlu0 %3463
        %3465 = vrot.lane.b32.xlu0 %v3056, 24
        %v3466 = vpop.permute.xlu0 %3465
        %3467 = vrot.lane.b32.xlu0 %v3057, 24
        %v3468 = vpop.permute.xlu0 %3467
        %3469 = vrot.lane.b32.xlu0 %v3058, 24
        %v3470 = vpop.permute.xlu0 %3469
        %3471 = vrot.lane.b32.xlu0 %v3059, 24
        %v3472 = vpop.permute.xlu0 %3471
        %3473 = vrot.lane.b32.xlu0 %v3060, 24
        %v3474 = vpop.permute.xlu0 %3473
        %3475 = vrot.lane.b32.xlu0 %v3061, 24
        %v3476 = vpop.permute.xlu0 %3475
        %3477 = vrot.lane.b32.xlu0 %v3062, 24
        %v3478 = vpop.permute.xlu0 %3477
        %3479 = vrot.lane.b32.xlu0 %v3063, 24
        %v3480 = vpop.permute.xlu0 %3479
        %3481 = vrot.lane.b32.xlu0 %v3064, 24
        %v3482 = vpop.permute.xlu0 %3481
        %3483 = vrot.lane.b32.xlu0 %v3065, 24
        %v3484 = vpop.permute.xlu0 %3483
        %3485 = vrot.lane.b32.xlu0 %v3066, 24
        %v3486 = vpop.permute.xlu0 %3485
        %3487 = vrot.lane.b32.xlu0 %v3067, 24
        %v3488 = vpop.permute.xlu0 %3487
        %3489 = vrot.lane.b32.xlu0 %v3068, 24
        %v3490 = vpop.permute.xlu0 %3489
        %3491 = vrot.lane.b32.xlu0 %v3069, 24
        %v3492 = vpop.permute.xlu0 %3491
        %3493 = vrot.lane.b32.xlu0 %v3070, 24
        %v3494 = vpop.permute.xlu0 %3493
        %3495 = vrot.lane.b32.xlu0 %v3071, 24
        %v3496 = vpop.permute.xlu0 %3495
        %3497 = vrot.lane.b32.xlu0 %v3072, 24
        %v3498 = vpop.permute.xlu0 %3497
        %3499 = vrot.lane.b32.xlu0 %v3073, 24
        %v3500 = vpop.permute.xlu0 %3499
        %3501 = vrot.lane.b32.xlu0 %v3074, 24
        %v3502 = vpop.permute.xlu0 %3501
        %3503 = vrot.lane.b32.xlu0 %v3075, 24
        %v3504 = vpop.permute.xlu0 %3503
        %3505 = vrot.lane.b32.xlu0 %v3076, 24
        %v3506 = vpop.permute.xlu0 %3505
        %3507 = vrot.lane.b32.xlu0 %v3077, 24
        %v3508 = vpop.permute.xlu0 %3507
        %3509 = vrot.lane.b32.xlu0 %v3078, 24
        %v3510 = vpop.permute.xlu0 %3509
        %3511 = vrot.lane.b32.xlu0 %v3079, 24
        %v3512 = vpop.permute.xlu0 %3511
        %3513 = vrot.lane.b32.xlu0 %v3080, 24
        %v3514 = vpop.permute.xlu0 %3513
        %3515 = vrot.lane.b32.xlu0 %v3081, 24
        %v3516 = vpop.permute.xlu0 %3515
        %3517 = vrot.lane.b32.xlu0 %v3082, 24
        %v3518 = vpop.permute.xlu0 %3517
        %3519 = vrot.lane.b32.xlu0 %v3083, 24
        %v3520 = vpop.permute.xlu0 %3519
        %3521 = vrot.lane.b32.xlu0 %v3084, 24
        %v3522 = vpop.permute.xlu0 %3521
        %3523 = vrot.lane.b32.xlu0 %v3085, 24
        %v3524 = vpop.permute.xlu0 %3523
        %3525 = vrot.lane.b32.xlu0 %v3086, 24
        %v3526 = vpop.permute.xlu0 %3525
        %3527 = vrot.lane.b32.xlu0 %v3087, 24
        %v3528 = vpop.permute.xlu0 %3527
        %3529 = vrot.lane.b32.xlu0 %v3088, 24
        %v3530 = vpop.permute.xlu0 %3529
        %3531 = vrot.lane.b32.xlu0 %v3089, 24
        %v3532 = vpop.permute.xlu0 %3531
        %3533 = vrot.lane.b32.xlu0 %v3090, 24
        %v3534 = vpop.permute.xlu0 %3533
        %3535 = vrot.lane.b32.xlu0 %v3091, 24
        %v3536 = vpop.permute.xlu0 %3535
        %3537 = vrot.lane.b32.xlu0 %v3092, 24
        %v3538 = vpop.permute.xlu0 %3537
        %3539 = vrot.lane.b32.xlu0 %v3093, 24
        %v3540 = vpop.permute.xlu0 %3539
        %3541 = vrot.lane.b32.xlu0 %v3094, 24
        %v3542 = vpop.permute.xlu0 %3541
        %vm3607 = vcmask 195584
        %v3608 = vsel %vm3607, %v1113, %v3160
        %v3609 = vsel %vm3607, %v1116, %v3162
        %v3610 = vsel %vm3607, %v1121, %v3164
        %v3611 = vsel %vm3607, %v1124, %v3166
        %v3612 = vsel %vm3607, %v1129, %v3168
        %v3613 = vsel %vm3607, %v1132, %v3170
        %v3614 = vsel %vm3607, %v1137, %v3172
        %v3615 = vsel %vm3607, %v1140, %v3174
        %v3616 = vsel %vm3607, %v1145, %v3176
        %v3617 = vsel %vm3607, %v1148, %v3178
        %v3618 = vsel %vm3607, %v1153, %v3180
        %v3619 = vsel %vm3607, %v1156, %v3182
        %v3620 = vsel %vm3607, %v1161, %v3184
        %v3621 = vsel %vm3607, %v1164, %v3186
        %v3622 = vsel %vm3607, %v1169, %v3188
        %v3623 = vsel %vm3607, %v1172, %v3190
        %v3624 = vsel %vm3607, %v1177, %v3192
        %v3625 = vsel %vm3607, %v1180, %v3194
        %v3626 = vsel %vm3607, %v1185, %v3196
        %v3627 = vsel %vm3607, %v1188, %v3198
        %v3628 = vsel %vm3607, %v1193, %v3200
        %v3629 = vsel %vm3607, %v1196, %v3202
        %v3630 = vsel %vm3607, %v1201, %v3204
        %v3631 = vsel %vm3607, %v1204, %v3206
        %v3632 = vsel %vm3607, %v1209, %v3208
        %v3633 = vsel %vm3607, %v1212, %v3210
        %v3634 = vsel %vm3607, %v1217, %v3212
        %v3635 = vsel %vm3607, %v1220, %v3214
        %v3636 = vsel %vm3607, %v1225, %v3216
        %v3637 = vsel %vm3607, %v1228, %v3218
        %v3638 = vsel %vm3607, %v1233, %v3220
        %v3639 = vsel %vm3607, %v1236, %v3222
        %v3640 = vsel %vm3607, %v1241, %v3224
        %v3641 = vsel %vm3607, %v1244, %v3226
        %v3642 = vsel %vm3607, %v1249, %v3228
        %v3643 = vsel %vm3607, %v1252, %v3230
        %v3644 = vsel %vm3607, %v1257, %v3232
        %v3645 = vsel %vm3607, %v1260, %v3234
        %v3646 = vsel %vm3607, %v1265, %v3236
        %v3647 = vsel %vm3607, %v1268, %v3238
        %v3648 = vsel %vm3607, %v1273, %v3240
        %v3649 = vsel %vm3607, %v1276, %v3242
        %v3650 = vsel %vm3607, %v1281, %v3244
        %v3651 = vsel %vm3607, %v1284, %v3246
        %v3652 = vsel %vm3607, %v1289, %v3248
        %v3653 = vsel %vm3607, %v1292, %v3250
        %v3654 = vsel %vm3607, %v1297, %v3252
        %v3655 = vsel %vm3607, %v1300, %v3254
        %v3656 = vsel %vm3607, %v1305, %v3256
        %v3657 = vsel %vm3607, %v1308, %v3258
        %v3658 = vsel %vm3607, %v1313, %v3260
        %v3659 = vsel %vm3607, %v1316, %v3262
        %v3660 = vsel %vm3607, %v1321, %v3264
        %v3661 = vsel %vm3607, %v1324, %v3266
        %v3662 = vsel %vm3607, %v1329, %v3268
        %v3663 = vsel %vm3607, %v1332, %v3270
        %v3664 = vsel %vm3607, %v1337, %v3272
        %v3665 = vsel %vm3607, %v1340, %v3274
        %v3666 = vsel %vm3607, %v1345, %v3276
        %v3667 = vsel %vm3607, %v1348, %v3278
        %v3668 = vsel %vm3607, %v1353, %v3280
        %v3669 = vsel %vm3607, %v1356, %v3282
        %v3670 = vsel %vm3607, %v1361, %v3284
        %v3671 = vsel %vm3607, %v1364, %v3286
        %vm3672 = vcmask 220160
        %v3673 = vsel %vm3672, %v3608, %v3416
        %v3674 = vsel %vm3672, %v3609, %v3418
        %v3675 = vsel %vm3672, %v3610, %v3420
        %v3676 = vsel %vm3672, %v3611, %v3422
        %v3677 = vsel %vm3672, %v3612, %v3424
        %v3678 = vsel %vm3672, %v3613, %v3426
        %v3679 = vsel %vm3672, %v3614, %v3428
        %v3680 = vsel %vm3672, %v3615, %v3430
        %v3681 = vsel %vm3672, %v3616, %v3432
        %v3682 = vsel %vm3672, %v3617, %v3434
        %v3683 = vsel %vm3672, %v3618, %v3436
        %v3684 = vsel %vm3672, %v3619, %v3438
        %v3685 = vsel %vm3672, %v3620, %v3440
        %v3686 = vsel %vm3672, %v3621, %v3442
        %v3687 = vsel %vm3672, %v3622, %v3444
        %v3688 = vsel %vm3672, %v3623, %v3446
        %v3689 = vsel %vm3672, %v3624, %v3448
        %v3690 = vsel %vm3672, %v3625, %v3450
        %v3691 = vsel %vm3672, %v3626, %v3452
        %v3692 = vsel %vm3672, %v3627, %v3454
        %v3693 = vsel %vm3672, %v3628, %v3456
        %v3694 = vsel %vm3672, %v3629, %v3458
        %v3695 = vsel %vm3672, %v3630, %v3460
        %v3696 = vsel %vm3672, %v3631, %v3462
        %v3697 = vsel %vm3672, %v3632, %v3464
        %v3698 = vsel %vm3672, %v3633, %v3466
        %v3699 = vsel %vm3672, %v3634, %v3468
        %v3700 = vsel %vm3672, %v3635, %v3470
        %v3701 = vsel %vm3672, %v3636, %v3472
        %v3702 = vsel %vm3672, %v3637, %v3474
        %v3703 = vsel %vm3672, %v3638, %v3476
        %v3704 = vsel %vm3672, %v3639, %v3478
        %v3705 = vsel %vm3672, %v3640, %v3480
        %v3706 = vsel %vm3672, %v3641, %v3482
        %v3707 = vsel %vm3672, %v3642, %v3484
        %v3708 = vsel %vm3672, %v3643, %v3486
        %v3709 = vsel %vm3672, %v3644, %v3488
        %v3710 = vsel %vm3672, %v3645, %v3490
        %v3711 = vsel %vm3672, %v3646, %v3492
        %v3712 = vsel %vm3672, %v3647, %v3494
        %v3713 = vsel %vm3672, %v3648, %v3496
        %v3714 = vsel %vm3672, %v3649, %v3498
        %v3715 = vsel %vm3672, %v3650, %v3500
        %v3716 = vsel %vm3672, %v3651, %v3502
        %v3717 = vsel %vm3672, %v3652, %v3504
        %v3718 = vsel %vm3672, %v3653, %v3506
        %v3719 = vsel %vm3672, %v3654, %v3508
        %v3720 = vsel %vm3672, %v3655, %v3510
        %v3721 = vsel %vm3672, %v3656, %v3512
        %v3722 = vsel %vm3672, %v3657, %v3514
        %v3723 = vsel %vm3672, %v3658, %v3516
        %v3724 = vsel %vm3672, %v3659, %v3518
        %v3725 = vsel %vm3672, %v3660, %v3520
        %v3726 = vsel %vm3672, %v3661, %v3522
        %v3727 = vsel %vm3672, %v3662, %v3524
        %v3728 = vsel %vm3672, %v3663, %v3526
        %v3729 = vsel %vm3672, %v3664, %v3528
        %v3730 = vsel %vm3672, %v3665, %v3530
        %v3731 = vsel %vm3672, %v3666, %v3532
        %v3732 = vsel %vm3672, %v3667, %v3534
        %v3733 = vsel %vm3672, %v3668, %v3536
        %v3734 = vsel %vm3672, %v3669, %v3538
        %v3735 = vsel %vm3672, %v3670, %v3540
        %v3736 = vsel %vm3672, %v3671, %v3542
        %vm3737 = vcmask 244736
        %v3738 = vsel %vm3737, %v3673, 0.0
        %v3739 = vsel %vm3737, %v3674, 0.0
        %v3740 = vsel %vm3737, %v3675, 0.0
        %v3741 = vsel %vm3737, %v3676, 0.0
        %v3742 = vsel %vm3737, %v3677, 0.0
        %v3743 = vsel %vm3737, %v3678, 0.0
        %v3744 = vsel %vm3737, %v3679, 0.0
        %v3745 = vsel %vm3737, %v3680, 0.0
        %v3746 = vsel %vm3737, %v3681, 0.0
        %v3747 = vsel %vm3737, %v3682, 0.0
        %v3748 = vsel %vm3737, %v3683, 0.0
        %v3749 = vsel %vm3737, %v3684, 0.0
        %v3750 = vsel %vm3737, %v3685, 0.0
        %v3751 = vsel %vm3737, %v3686, 0.0
        %v3752 = vsel %vm3737, %v3687, 0.0
        %v3753 = vsel %vm3737, %v3688, 0.0
        %v3754 = vsel %vm3737, %v3689, 0.0
        %v3755 = vsel %vm3737, %v3690, 0.0
        %v3756 = vsel %vm3737, %v3691, 0.0
        %v3757 = vsel %vm3737, %v3692, 0.0
        %v3758 = vsel %vm3737, %v3693, 0.0
        %v3759 = vsel %vm3737, %v3694, 0.0
        %v3760 = vsel %vm3737, %v3695, 0.0
        %v3761 = vsel %vm3737, %v3696, 0.0
        %v3762 = vsel %vm3737, %v3697, 0.0
        %v3763 = vsel %vm3737, %v3698, 0.0
        %v3764 = vsel %vm3737, %v3699, 0.0
        %v3765 = vsel %vm3737, %v3700, 0.0
        %v3766 = vsel %vm3737, %v3701, 0.0
        %v3767 = vsel %vm3737, %v3702, 0.0
        %v3768 = vsel %vm3737, %v3703, 0.0
        %v3769 = vsel %vm3737, %v3704, 0.0
        %v3770 = vsel %vm3737, %v3705, 0.0
        %v3771 = vsel %vm3737, %v3706, 0.0
        %v3772 = vsel %vm3737, %v3707, 0.0
        %v3773 = vsel %vm3737, %v3708, 0.0
        %v3774 = vsel %vm3737, %v3709, 0.0
        %v3775 = vsel %vm3737, %v3710, 0.0
        %v3776 = vsel %vm3737, %v3711, 0.0
        %v3777 = vsel %vm3737, %v3712, 0.0
        %v3778 = vsel %vm3737, %v3713, 0.0
        %v3779 = vsel %vm3737, %v3714, 0.0
        %v3780 = vsel %vm3737, %v3715, 0.0
        %v3781 = vsel %vm3737, %v3716, 0.0
        %v3782 = vsel %vm3737, %v3717, 0.0
        %v3783 = vsel %vm3737, %v3718, 0.0
        %v3784 = vsel %vm3737, %v3719, 0.0
        %v3785 = vsel %vm3737, %v3720, 0.0
        %v3786 = vsel %vm3737, %v3721, 0.0
        %v3787 = vsel %vm3737, %v3722, 0.0
        %v3788 = vsel %vm3737, %v3723, 0.0
        %v3789 = vsel %vm3737, %v3724, 0.0
        %v3790 = vsel %vm3737, %v3725, 0.0
        %v3791 = vsel %vm3737, %v3726, 0.0
        %v3792 = vsel %vm3737, %v3727, 0.0
        %v3793 = vsel %vm3737, %v3728, 0.0
        %v3794 = vsel %vm3737, %v3729, 0.0
        %v3795 = vsel %vm3737, %v3730, 0.0
        %v3796 = vsel %vm3737, %v3731, 0.0
        %v3797 = vsel %vm3737, %v3732, 0.0
        %v3798 = vsel %vm3737, %v3733, 0.0
        %v3799 = vsel %vm3737, %v3734, 0.0
        %v3800 = vsel %vm3737, %v3735, 0.0
        %v3801 = vsel %vm3737, %v3736, 0.0
        %3802 = vst [vmem:[%s242] sm:$0xff] %v3738
        %3803 = vst [vmem:[%s242 + $0x8] sm:$0xff] %v3739
        %3804 = vst [vmem:[%s242 + $0x10] sm:$0xff] %v3740
        %3805 = vst [vmem:[%s242 + $0x18] sm:$0xff] %v3741
        %3806 = vst [vmem:[%s242 + $0x20] sm:$0xff] %v3742
        %3807 = vst [vmem:[%s242 + $0x28] sm:$0xff] %v3743
        %3808 = vst [vmem:[%s242 + $0x30] sm:$0xff] %v3744
        %3809 = vst [vmem:[%s242 + $0x38] sm:$0xff] %v3745
        %3810 = vst [vmem:[%s242 + $0x40] sm:$0xff] %v3746
        %3811 = vst [vmem:[%s242 + $0x48] sm:$0xff] %v3747
        %3812 = vst [vmem:[%s242 + $0x50] sm:$0xff] %v3748
        %3813 = vst [vmem:[%s242 + $0x58] sm:$0xff] %v3749
        %3814 = vst [vmem:[%s242 + $0x60] sm:$0xff] %v3750
        %3815 = vst [vmem:[%s242 + $0x68] sm:$0xff] %v3751
        %3816 = vst [vmem:[%s242 + $0x70] sm:$0xff] %v3752
        %3817 = vst [vmem:[%s242 + $0x78] sm:$0xff] %v3753
        %3818 = vst [vmem:[%s242 + $0x80] sm:$0xff] %v3754
        %3819 = vst [vmem:[%s242 + $0x88] sm:$0xff] %v3755
        %3820 = vst [vmem:[%s242 + $0x90] sm:$0xff] %v3756
        %3821 = vst [vmem:[%s242 + $0x98] sm:$0xff] %v3757
        %3822 = vst [vmem:[%s242 + $0xa0] sm:$0xff] %v3758
        %3823 = vst [vmem:[%s242 + $0xa8] sm:$0xff] %v3759
        %3824 = vst [vmem:[%s242 + $0xb0] sm:$0xff] %v3760
        %3825 = vst [vmem:[%s242 + $0xb8] sm:$0xff] %v3761
        %3826 = vst [vmem:[%s242 + $0xc0] sm:$0xff] %v3762
        %3827 = vst [vmem:[%s242 + $0xc8] sm:$0xff] %v3763
        %3828 = vst [vmem:[%s242 + $0xd0] sm:$0xff] %v3764
        %3829 = vst [vmem:[%s242 + $0xd8] sm:$0xff] %v3765
        %3830 = vst [vmem:[%s242 + $0xe0] sm:$0xff] %v3766
        %3831 = vst [vmem:[%s242 + $0xe8] sm:$0xff] %v3767
        %3832 = vst [vmem:[%s242 + $0xf0] sm:$0xff] %v3768
        %3833 = vst [vmem:[%s242 + $0xf8] sm:$0xff] %v3769
        %3834 = vst [vmem:[%s242 + $0x100] sm:$0xff] %v3770
        %3835 = vst [vmem:[%s242 + $0x108] sm:$0xff] %v3771
        %3836 = vst [vmem:[%s242 + $0x110] sm:$0xff] %v3772
        %3837 = vst [vmem:[%s242 + $0x118] sm:$0xff] %v3773
        %3838 = vst [vmem:[%s242 + $0x120] sm:$0xff] %v3774
        %3839 = vst [vmem:[%s242 + $0x128] sm:$0xff] %v3775
        %3840 = vst [vmem:[%s242 + $0x130] sm:$0xff] %v3776
        %3841 = vst [vmem:[%s242 + $0x138] sm:$0xff] %v3777
        %3842 = vst [vmem:[%s242 + $0x140] sm:$0xff] %v3778
        %3843 = vst [vmem:[%s242 + $0x148] sm:$0xff] %v3779
        %3844 = vst [vmem:[%s242 + $0x150] sm:$0xff] %v3780
        %3845 = vst [vmem:[%s242 + $0x158] sm:$0xff] %v3781
        %3846 = vst [vmem:[%s242 + $0x160] sm:$0xff] %v3782
        %3847 = vst [vmem:[%s242 + $0x168] sm:$0xff] %v3783
        %3848 = vst [vmem:[%s242 + $0x170] sm:$0xff] %v3784
        %3849 = vst [vmem:[%s242 + $0x178] sm:$0xff] %v3785
        %3850 = vst [vmem:[%s242 + $0x180] sm:$0xff] %v3786
        %3851 = vst [vmem:[%s242 + $0x188] sm:$0xff] %v3787
        %3852 = vst [vmem:[%s242 + $0x190] sm:$0xff] %v3788
        %3853 = vst [vmem:[%s242 + $0x198] sm:$0xff] %v3789
        %3854 = vst [vmem:[%s242 + $0x1a0] sm:$0xff] %v3790
        %3855 = vst [vmem:[%s242 + $0x1a8] sm:$0xff] %v3791
        %3856 = vst [vmem:[%s242 + $0x1b0] sm:$0xff] %v3792
        %3857 = vst [vmem:[%s242 + $0x1b8] sm:$0xff] %v3793
        %3858 = vst [vmem:[%s242 + $0x1c0] sm:$0xff] %v3794
        %3859 = vst [vmem:[%s242 + $0x1c8] sm:$0xff] %v3795
        %3860 = vst [vmem:[%s242 + $0x1d0] sm:$0xff] %v3796
        %3861 = vst [vmem:[%s242 + $0x1d8] sm:$0xff] %v3797
        %3862 = vst [vmem:[%s242 + $0x1e0] sm:$0xff] %v3798
        %3863 = vst [vmem:[%s242 + $0x1e8] sm:$0xff] %v3799
        %3864 = vst [vmem:[%s242 + $0x1f0] sm:$0xff] %v3800
        %3865 = vst [vmem:[%s242 + $0x1f8] sm:$0xff] %v3801
        %s3866 = sand.u32 %s140, 1
        %s3867 = scalar_lea.sflag [#allocation4], %s3866
        %s3868 = sand.u32 %s140, 1
        %s3869 = smul.addr %s3868, 512
        %s3870 = scalar_lea.vmem [#allocation5], %s3869
        // Predicated region
        $region45: #{tpu_custom_call.1} parent=39 // pred_check
          %p3871 = pneg %p150
        $region46: #{tpu_custom_call.1} parent=39 // pred_check_branch
          %3873 = sbr.rel (%p3871) target = $region48
        $region47: #{tpu_custom_call.1} parent=39 // pred_region
          %s3874 = smul.u32 64, %s22
          %s3876 = ssub.s32 8192, 8192
          %3877 = vsyncadd %s3867, %s3876
          %s3878 = smul.addr %s3874, 128
          %s3879 = scalar_lea.hbm %s5, %s3878
          %s3880 = sshll.u32 %s3870, 4
          %s3881 = int_to_ptr.vmem [resolvable:$true] %s3880
          %3886 = dma.vmem_to_hbm [thread:$0]  %s3881, 8192, %s3879, %s3867, 128, 128, 8
        $region48: #{tpu_custom_call.1} parent=39 // pred_fallthru
          _
      $region40: #{tpu_custom_call.1} parent=5 // pred_fallthru
        _
      %p3887 = scmp.le.s32.totalorder 2, %s17
      // Predicated region
      $region49: #{tpu_custom_call.1} parent=5 // pred_check
        %p3888 = pneg %p3887
      $region50: #{tpu_custom_call.1} parent=5 // pred_check_branch
        %3890 = sbr.rel (%p3888) target = $region52
      $region51: #{tpu_custom_call.1} parent=5 // pred_region
        %s3891 = ssub.s32 %s17, 2
        // Predicated region
        $region53: #{tpu_custom_call.1} parent=51 // pred_check
          %p3892 = pneg %p156
        $region54: #{tpu_custom_call.1} parent=51 // pred_check_branch
          %3894 = sbr.rel (%p3892) target = $region56
        $region55: #{tpu_custom_call.1} parent=51 // pred_region
          %s3895 = sand.u32 %s141, 1
          %s3896 = scalar_lea.sflag [#allocation4], %s3895
          %s3897 = sand.u32 %s141, 1
          %s3898 = smul.addr %s3897, 512
          %s3899 = scalar_lea.vmem [#allocation5], %s3898
          %3900 = dma.done %s3896, 8192
        $region56: #{tpu_custom_call.1} parent=51 // pred_fallthru
          _
      $region52: #{tpu_custom_call.1} parent=5 // pred_fallthru
        _
    $region6: #{tpu_custom_call.1} parent=1 // loop_footer
      %s21 = sadd.s32 1, %s17
    $region7: #{tpu_custom_call.1} parent=1 // loop_footer_branch
      %16 = sbr.rel target = $region3
    $region8: #{tpu_custom_call.1} parent=1 // loop_exit
      _
    %3901 = vsyncpa [#allocation3], 1
    %s3902 = scalar_lea.sflag [#allocation3], 1
    %3903 = vsyncpa %s3902, 1
    %3904 = vsyncpa [#allocation4], 1
    %s3905 = scalar_lea.sflag [#allocation4], 1
    %3906 = vsyncpa %s3905, 1

</llo_original>
